<compile_context>
chip_gen: v7x
topology: tpu7x:2x2x1
jax: 0.10.0
libtpu: 0.0.40
codegen_flags: <defaults>
</compile_context>

<pallas_src>
import functools

import jax
import jax.numpy as jnp
from jax.experimental import pallas as pl
from jax.experimental.pallas import tpu as pltpu


# --------------------------------------------------------------------------
# helpers
# --------------------------------------------------------------------------

def _round_up(n, m):
    return ((n + m - 1) // m) * m


def _pick_hw_tile(hw, max_tile=2048):
    """Largest 128-multiple tile that divides hw (or the whole axis if small)."""
    if hw <= max_tile:
        return hw
    t = max_tile - (max_tile % 128)
    while t >= 128:
        if hw % t == 0:
            return t
        t -= 128
    return hw


def _pad_reshape(x, c, cp):
    """(..., C, H, W) f32 -> (..., CP, H*W) bf16 with a ones channel at index C."""
    lead = x.shape[:-3]
    h, w = x.shape[-2], x.shape[-1]
    ones = jnp.ones(lead + (1, h, w), x.dtype)
    pad = jnp.zeros(lead + (cp - c - 1, h, w), x.dtype)
    xp = jnp.concatenate([x, ones, pad], axis=-3)
    return xp.reshape(lead + (cp, h * w)).astype(jnp.bfloat16)


def _pack_params(w, b, cp, kp):
    """w:(C,K), b:(1,K) -> augmented parameter matrix (CP, KP)."""
    c, k = w.shape
    mat = jnp.zeros((cp, kp), jnp.float32)
    mat = mat.at[:c, :k].set(w)
    mat = mat.at[c, :k].set(b.reshape(k))
    return mat


# --------------------------------------------------------------------------
# Pallas kernels
# --------------------------------------------------------------------------

def _fused_forward_kernel(x_ref, wcat_ref, feat_ref, logits_ref, aprob_ref,
                          *, inv_hw, num_classes, kp):
    """GAP feats (accumulated over the HW grid axis) + student/anchor/EMA logits
    via a single concatenated matmul + anchor mean max-softmax-prob scalar."""
    h = pl.program_id(0)
    nh = pl.num_programs(0)

    @pl.when(h == 0)
    def _():
        feat_ref[...] = jnp.zeros_like(feat_ref)

    # lane-dense reduction over the flattened spatial axis (bf16 -> f32 accum)
    feat_ref[...] += jnp.sum(x_ref[...].astype(jnp.float32), axis=-1)

    @pl.when(h == nh - 1)
    def _():
        feats = feat_ref[...] * inv_hw            # (B, CP): GAP + ones column
        feat_ref[...] = feats
        logits = jnp.dot(feats, wcat_ref[...],
                         preferred_element_type=jnp.float32)   # (B, 3*KP)
        logits_ref[...] = logits

        # anchor softmax max-probability, mean over batch (padded classes masked)
        za = logits[:, kp:2 * kp]
        col = jax.lax.broadcasted_iota(jnp.int32, za.shape, 1)
        za = jnp.where(col < num_classes, za, -1e30)
        zmax = jnp.max(za, axis=-1, keepdims=True)
        denom = jnp.sum(jnp.exp(za - zmax), axis=-1, keepdims=True)
        pmax = pl.reciprocal(denom, approx=True)  # max prob = 1 / sum(exp(z-max))
        aprob_ref[...] = jnp.mean(pmax, keepdims=True)


def fused_forward(x_pad, w_cat, *, num_classes, kp):
    b, cp, hw = x_pad.shape
    k3 = w_cat.shape[1]
    thw = _pick_hw_tile(hw)
    n_hw = hw // thw
    kernel = functools.partial(_fused_forward_kernel,
                               inv_hw=1.0 / hw, num_classes=num_classes, kp=kp)
    return pl.pallas_call(
        kernel,
        out_shape=(jax.ShapeDtypeStruct((b, cp), jnp.float32),
                   jax.ShapeDtypeStruct((b, k3), jnp.float32),
                   jax.ShapeDtypeStruct((1, 1), jnp.float32)),
        grid=(n_hw,),
        in_specs=[pl.BlockSpec((b, cp, thw), lambda h: (0, 0, h)),
                  pl.BlockSpec((cp, k3), lambda h: (0, 0))],
        out_specs=(pl.BlockSpec((b, cp), lambda h: (0, 0)),
                   pl.BlockSpec((b, k3), lambda h: (0, 0)),
                   pl.BlockSpec((1, 1), lambda h: (0, 0))),
        compiler_params=pltpu.CompilerParams(
            dimension_semantics=("arbitrary",)),
    )(x_pad, w_cat)


def _aug_teacher_kernel(x_ref, w_ref, out_ref, feat_acc, *, inv_hw, inv_naug):
    """Running mean of teacher logits over the augmentation grid axis."""
    a = pl.program_id(0)
    h = pl.program_id(1)
    nh = pl.num_programs(1)

    @pl.when(jnp.logical_and(a == 0, h == 0))
    def _():
        out_ref[...] = jnp.zeros_like(out_ref)

    @pl.when(h == 0)
    def _():
        feat_acc[...] = jnp.zeros_like(feat_acc)

    feat_acc[...] += jnp.sum(x_ref[...].astype(jnp.float32), axis=-1)

    @pl.when(h == nh - 1)
    def _():
        feats = feat_acc[...] * inv_hw
        out_ref[...] += inv_naug * jnp.dot(feats, w_ref[...],
                                           preferred_element_type=jnp.float32)


def aug_teacher_mean(x_aug, w_ema, *, num_aug):
    a, b, cp, hw = x_aug.shape
    kp = w_ema.shape[1]
    thw = _pick_hw_tile(hw)
    n_hw = hw // thw
    kernel = functools.partial(_aug_teacher_kernel,
                               inv_hw=1.0 / hw, inv_naug=1.0 / num_aug)
    return pl.pallas_call(
        kernel,
        out_shape=jax.ShapeDtypeStruct((b, kp), jnp.float32),
        grid=(a, n_hw),
        in_specs=[pl.BlockSpec((None, b, cp, thw), lambda ai, hi: (ai, 0, 0, hi)),
                  pl.BlockSpec((cp, kp), lambda ai, hi: (0, 0))],
        out_specs=pl.BlockSpec((b, kp), lambda ai, hi: (0, 0)),
        scratch_shapes=[pltpu.VMEM((b, cp), jnp.float32)],
        compiler_params=pltpu.CompilerParams(
            dimension_semantics=("arbitrary", "arbitrary")),
    )(x_aug, w_ema)


def _entropy_grad_kernel(logits_ref, ema_ref, feat_ref, g_ref, loss_ref,
                         *, num_classes, inv_b):
    """softmax_entropy_cifar(outputs, outputs_ema).mean(0) + analytic gradient
    wrt the augmented weight matrix (padded classes masked)."""
    z = logits_ref[...]
    ze = ema_ref[...]
    col = jax.lax.broadcasted_iota(jnp.int32, z.shape, 1)
    valid = col < num_classes
    z = jnp.where(valid, z, -1e30)
    ze = jnp.where(valid, ze, -1e30)

    zs = z - jnp.max(z, axis=1, keepdims=True)
    ez = jnp.exp(zs)
    sz = jnp.sum(ez, axis=1, keepdims=True)
    logp = zs - jnp.log(sz)
    p = ez * pl.reciprocal(sz, approx=True)                       # softmax(x)

    zes = ze - jnp.max(ze, axis=1, keepdims=True)
    eze = jnp.exp(zes)
    pe = eze * pl.reciprocal(jnp.sum(eze, axis=1, keepdims=True), approx=True)

    ent = -jnp.sum(jnp.where(valid, pe * logp, 0.0), axis=1, keepdims=True)
    loss_ref[...] = jnp.mean(ent, keepdims=True)                  # (1, 1)

    # d/d z of mean_b[-(pe . logp)] = (p - pe)/B ; grad wrt W = feats^T @ dz
    dz = jnp.where(valid, (p - pe) * inv_b, 0.0)
    g_ref[...] = jax.lax.dot_general(feat_ref[...], dz, (((0,), (0,)), ((), ())),
                                     preferred_element_type=jnp.float32)


def entropy_and_grads(logits, ema_logits, feats, *, num_classes):
    b, kp = logits.shape
    cp = feats.shape[1]
    kernel = functools.partial(_entropy_grad_kernel,
                               num_classes=num_classes, inv_b=1.0 / b)
    return pl.pallas_call(
        kernel,
        out_shape=(jax.ShapeDtypeStruct((cp, kp), jnp.float32),
                   jax.ShapeDtypeStruct((1, 1), jnp.float32)),
        grid=(1,),
        in_specs=[pl.BlockSpec((b, kp), lambda i: (0, 0)),
                  pl.BlockSpec((b, kp), lambda i: (0, 0)),
                  pl.BlockSpec((b, cp), lambda i: (0, 0))],
        out_specs=(pl.BlockSpec((cp, kp), lambda i: (0, 0)),
                   pl.BlockSpec((1, 1), lambda i: (0, 0))),
        compiler_params=pltpu.CompilerParams(
            dimension_semantics=("arbitrary",)),
    )(logits, ema_logits, feats)


def _param_update_kernel(w_ref, g_ref, ema_ref, state_ref, mask_ref,
                         w_out, ema_out, *, lr, alpha):
    """Fused SGD step + EMA teacher update + stochastic restore."""
    w_sgd = w_ref[...] - lr * g_ref[...]
    ema_out[...] = alpha * ema_ref[...] + (1.0 - alpha) * w_sgd
    m = mask_ref[...]
    w_out[...] = state_ref[...] * m + w_sgd * (1.0 - m)


def param_update(w, g, ema, state, mask, *, lr, alpha):
    shape = w.shape
    kernel = functools.partial(_param_update_kernel, lr=float(lr), alpha=float(alpha))
    return pl.pallas_call(
        kernel,
        out_shape=(jax.ShapeDtypeStruct(shape, jnp.float32),
                   jax.ShapeDtypeStruct(shape, jnp.float32)),
        grid=(1,),
        in_specs=[pl.BlockSpec(shape, lambda i: (0, 0))] * 5,
        out_specs=(pl.BlockSpec(shape, lambda i: (0, 0)),
                   pl.BlockSpec(shape, lambda i: (0, 0))),
        input_output_aliases={0: 0, 2: 1},   # update w / ema in place
        compiler_params=pltpu.CompilerParams(
            dimension_semantics=("arbitrary",)),
    )(w, g, ema, state, mask)


# --------------------------------------------------------------------------
# JAX glue (augmentation)
# --------------------------------------------------------------------------

def _transform(x, key):
    # stand-in for get_tta_transforms: per-image horizontal flip + gaussian noise
    kf, kn = jax.random.split(key)
    b = x.shape[0]
    do_flip = jax.random.bernoulli(kf, 0.5, (b,))
    xf = jnp.where(do_flip[:, None, None, None], jnp.flip(x, axis=3), x)
    return xf + 0.01 * jax.random.normal(kn, x.shape, x.dtype)


# --------------------------------------------------------------------------
# CoTTA wrapper (JAX port of the PyTorch module)
# --------------------------------------------------------------------------

class CoTTA:
    """CoTTA adapts a model by entropy minimization during testing (JAX/Pallas)."""

    def __init__(self, model_params, lr, mt_alpha, rst_m, ap, dataset_name,
                 steps=1, episodic=False, num_aug=32, seed=0):
        assert steps > 0, "cotta requires >= 1 step(s) to forward and update"
        if "cifar" not in dataset_name:
            # TODO(synk): softmax_entropy_imagenet (symmetric) gradient path not implemented.
            raise NotImplementedError("only the cifar entropy variant is implemented")

        self.lr = float(lr)
        self.steps = steps
        self.episodic = episodic
        self.mt = float(mt_alpha)
        self.rst = float(rst_m)
        self.ap = float(ap)
        self.num_aug = int(num_aug)

        w = jnp.asarray(model_params["w"], jnp.float32)
        b = jnp.asarray(model_params["b"], jnp.float32).reshape(1, -1)
        self.C, self.K = w.shape
        self.CP = _round_up(self.C + 1, 8)      # weights + bias row, sublane-aligned
        self.KP = _round_up(self.K, 128)        # lane-dense classifier head

        w0 = _pack_params(w, b, self.CP, self.KP)
        # copy_model_and_optimizer(): snapshot + anchor + EMA teacher
        self.model_W = w0
        self.state_W = w0
        self.anchor_W = w0
        self.ema_W = w0
        self.optimizer_state = {}               # plain SGD has no state

        self._rng = jax.random.PRNGKey(seed)
        self._counter = 0
        self._last_loss = None
        self._step_fn = self._build_step()

    # --- state management -------------------------------------------------
    def reset(self):
        self.model_W = self.state_W
        self.anchor_W = self.state_W
        self.ema_W = self.state_W

    def _next_key(self):
        self._counter += 1
        return jax.random.fold_in(self._rng, self._counter)

    # --- jitted adaptation step --------------------------------------------
    def _build_step(self):
        C, K, CP, KP = self.C, self.K, self.CP, self.KP
        lr, mt, rst, ap, num_aug = self.lr, self.mt, self.rst, self.ap, self.num_aug

        def step(x_nchw, model_W, ema_W, anchor_W, state_W, key):
            x_pad = _pad_reshape(x_nchw, C, CP)                      # (B, CP, HW) bf16
            w_cat = jnp.concatenate([model_W, anchor_W, ema_W], axis=1)

            feats, logits_cat, aprob = fused_forward(x_pad, w_cat,
                                                     num_classes=K, kp=KP)
            outputs = logits_cat[:, :KP]                             # student
            standard_ema = logits_cat[:, 2 * KP:3 * KP]              # teacher

            key_aug, key_mask = jax.random.split(key)

            def aug_branch(_):
                keys = jax.random.split(key_aug, num_aug)
                xa = jax.vmap(lambda kk: _transform(x_nchw, kk))(keys)   # (A,B,C,H,W)
                xa_pad = _pad_reshape(xa, C, CP)                         # (A,B,CP,HW)
                return aug_teacher_mean(xa_pad, ema_W, num_aug=num_aug)

            def std_branch(_):
                return standard_ema

            outputs_ema = jax.lax.cond(aprob[0, 0] < ap, aug_branch, std_branch, None)

            grads, loss = entropy_and_grads(outputs, outputs_ema, feats,
                                            num_classes=K)

            if rst > 0:
                mask = (jax.random.uniform(key_mask, (CP, KP)) < rst).astype(jnp.float32)
            else:
                mask = jnp.zeros((CP, KP), jnp.float32)

            new_W, new_ema = param_update(model_W, grads, ema_W, state_W, mask,
                                          lr=lr, alpha=mt)
            return outputs_ema[:, :K], new_W, new_ema, loss

        return jax.jit(step)

    # --- public API --------------------------------------------------------
    def forward(self, x_nchw):
        if self.episodic:
            self.reset()
        x = jnp.asarray(x_nchw, jnp.float32)
        outputs_ema = None
        for _ in range(self.steps):
            key = self._next_key()
            outputs_ema, self.model_W, self.ema_W, self._last_loss = self._step_fn(
                x, self.model_W, self.ema_W, self.anchor_W, self.state_W, key)
        return outputs_ema


# --------------------------------------------------------------------------
# main
# --------------------------------------------------------------------------

if __name__ == "__main__":
    key = jax.random.PRNGKey(0)
    B, C, H, W = 2, 4, 16, 16
    K = 10  # number of classes

    kx, kw = jax.random.split(key)
    x = jax.random.normal(kx, (B, C, H, W), jnp.float32)   # PyTorch-style NCHW input
    w = 0.1 * jax.random.normal(kw, (C, K), jnp.float32)
    b = jnp.zeros((1, K), jnp.float32)

    cotta = CoTTA(
        model_params={"w": w, "b": b},
        lr=1e-2, mt_alpha=0.999, rst_m=0.01, ap=0.92,
        dataset_name="cifar10", steps=1, episodic=False, num_aug=4, seed=0,
    )

    out = cotta.forward(x)
    jax.block_until_ready(out)
    assert out.shape == (B, K)
    print("KERNEL_OK")
</pallas_src>

<mosaic_0001>
module attributes {stable_mosaic.version = 11 : i64} {
  func.func @_fused_forward_kernel(%arg0: i32, %arg1: memref<2x8x256xbf16, #tpu.memory_space<vmem>>, %arg2: memref<8x384xf32, #tpu.memory_space<vmem>>, %arg3: memref<2x8xf32, #tpu.memory_space<vmem>>, %arg4: memref<2x384xf32, #tpu.memory_space<vmem>>, %arg5: memref<1x1xf32, #tpu.memory_space<vmem>>) attributes {dimension_semantics = [#tpu.dimension_semantics<arbitrary>], iteration_bounds = array<i64: 1>, scalar_prefetch = 0 : i64, scratch_operands = 0 : i64, tpu.core_type = #tpu.core_type<tc>, window_params = [{transform_indices = @transform_0, window_bounds = array<i64: 2, 8, 256>}, {pipeline_mode = #tpu.pipeline_mode<synchronous>, transform_indices = @transform_1, window_bounds = array<i64: 8, 384>}, {pipeline_mode = #tpu.pipeline_mode<synchronous>, transform_indices = @transform_2, window_bounds = array<i64: 2, 8>}, {pipeline_mode = #tpu.pipeline_mode<synchronous>, transform_indices = @transform_3, window_bounds = array<i64: 2, 384>}, {pipeline_mode = #tpu.pipeline_mode<synchronous>, transform_indices = @transform_4, window_bounds = array<i64: 1, 1>}]} {
    %c0_i32 = arith.constant 0 : i32
    %0 = arith.cmpi eq, %arg0, %c0_i32 : i32
    %1 = arith.extui %0 : i1 to i32
    %c0_i32_0 = arith.constant 0 : i32
    %2 = arith.cmpi ne, %1, %c0_i32_0 : i32
    scf.if %2 {
      %cst_9 = arith.constant 0.000000e+00 : f32
      %12 = vector.broadcast %cst_9 : f32 to vector<2x8xf32>
      %c0_10 = arith.constant 0 : index
      %c0_11 = arith.constant 0 : index
      %13 = vector.load %arg3[%c0_10, %c0_11] : memref<2x8xf32, #tpu.memory_space<vmem>>, vector<2x8xf32>
      tpu.vector_store %arg3[%c0_10, %c0_11], %12 {strides = array<i32>} : memref<2x8xf32, #tpu.memory_space<vmem>>, vector<2x8xf32>,
    } else {
    }
    %c0 = arith.constant 0 : index
    %c0_1 = arith.constant 0 : index
    %3 = vector.load %arg3[%c0, %c0_1] : memref<2x8xf32, #tpu.memory_space<vmem>>, vector<2x8xf32>
    %c0_2 = arith.constant 0 : index
    %c0_3 = arith.constant 0 : index
    %c0_4 = arith.constant 0 : index
    %4 = vector.load %arg1[%c0_2, %c0_3, %c0_4] : memref<2x8x256xbf16, #tpu.memory_space<vmem>>, vector<2x8x256xbf16>
    %5 = arith.extf %4 : vector<2x8x256xbf16> to vector<2x8x256xf32>
    %cst = arith.constant dense<0.000000e+00> : vector<2x8xf32>
    %6 = vector.multi_reduction <add>, %5, %cst [2] : vector<2x8x256xf32> to vector<2x8xf32>
    %7 = arith.addf %3, %6 : vector<2x8xf32>
    %c0_5 = arith.constant 0 : index
    %c0_6 = arith.constant 0 : index
    %8 = vector.load %arg3[%c0_5, %c0_6] : memref<2x8xf32, #tpu.memory_space<vmem>>, vector<2x8xf32>
    tpu.vector_store %arg3[%c0_5, %c0_6], %7 {strides = array<i32>} : memref<2x8xf32, #tpu.memory_space<vmem>>, vector<2x8xf32>,
    %c0_i32_7 = arith.constant 0 : i32
    %9 = arith.cmpi eq, %arg0, %c0_i32_7 : i32
    %10 = arith.extui %9 : i1 to i32
    %c0_i32_8 = arith.constant 0 : i32
    %11 = arith.cmpi ne, %10, %c0_i32_8 : i32
    scf.if %11 {
      %c0_9 = arith.constant 0 : index
      %c0_10 = arith.constant 0 : index
      %12 = vector.load %arg3[%c0_9, %c0_10] : memref<2x8xf32, #tpu.memory_space<vmem>>, vector<2x8xf32>
      %cst_11 = arith.constant 3.906250e-03 : f32
      %13 = vector.broadcast %cst_11 : f32 to vector<2x8xf32>
      %14 = arith.mulf %12, %13 : vector<2x8xf32>
      %c0_12 = arith.constant 0 : index
      %c0_13 = arith.constant 0 : index
      %15 = vector.load %arg3[%c0_12, %c0_13] : memref<2x8xf32, #tpu.memory_space<vmem>>, vector<2x8xf32>
      tpu.vector_store %arg3[%c0_12, %c0_13], %14 {strides = array<i32>} : memref<2x8xf32, #tpu.memory_space<vmem>>, vector<2x8xf32>,
      %c0_14 = arith.constant 0 : index
      %c0_15 = arith.constant 0 : index
      %16 = vector.load %arg2[%c0_14, %c0_15] : memref<8x384xf32, #tpu.memory_space<vmem>>, vector<8x384xf32>
      %cst_16 = arith.constant dense<0.000000e+00> : vector<2x384xf32>
      %17 = tpu.matmul %14, %16, %cst_16 {dimension_numbers = #tpu.dot_dimension_numbers<[1], [0], [0], [1], [0, 0, 1, 1], [], []>} : vector<2x8xf32>, vector<8x384xf32>, vector<2x384xf32> -> vector<2x384xf32>
      %c0_17 = arith.constant 0 : index
      %c0_18 = arith.constant 0 : index
      %18 = vector.load %arg4[%c0_17, %c0_18] : memref<2x384xf32, #tpu.memory_space<vmem>>, vector<2x384xf32>
      tpu.vector_store %arg4[%c0_17, %c0_18], %17 {strides = array<i32>} : memref<2x384xf32, #tpu.memory_space<vmem>>, vector<2x384xf32>,
      %19 = vector.extract_strided_slice %17 {offsets = [0, 128], sizes = [2, 128], strides = [1, 1]} : vector<2x384xf32> to vector<2x128xf32>
      %20 = tpu.iota {dimensions = array<i32: 1>} : vector<2x128xi32>
      %c10_i32 = arith.constant 10 : i32
      %21 = vector.broadcast %c10_i32 : i32 to vector<2x128xi32>
      %22 = arith.cmpi slt, %20, %21 : vector<2x128xi32>
      %cst_19 = arith.constant -1.000000e+30 : f32
      %23 = vector.broadcast %cst_19 : f32 to vector<2x128xf32>
      %24 = arith.select %22, %19, %23 : vector<2x128xi1>, vector<2x128xf32>
      %cst_20 = arith.constant dense<0xFF800000> : vector<2xf32>
      %25 = vector.multi_reduction <maximumf>, %24, %cst_20 [1] : vector<2x128xf32> to vector<2xf32>
      %26 = vector.shape_cast %25 : vector<2xf32> to vector<2x1xf32>
      %27 = vector.broadcast %26 : vector<2x1xf32> to vector<2x128xf32>
      %28 = arith.subf %24, %27 : vector<2x128xf32>
      %29 = math.exp %28 : vector<2x128xf32>
      %cst_21 = arith.constant dense<0.000000e+00> : vector<2xf32>
      %30 = vector.multi_reduction <add>, %29, %cst_21 [1] : vector<2x128xf32> to vector<2xf32>
      %31 = vector.shape_cast %30 : vector<2xf32> to vector<2x1xf32>
      %32 = tpu.reciprocal %31 {approx = true} : vector<2x1xf32> -> vector<2x1xf32>
      %33 = vector.shape_cast %32 : vector<2x1xf32> to vector<1x2x1xf32>
      %cst_22 = arith.constant dense<0.000000e+00> : vector<1xf32>
      %34 = vector.multi_reduction <add>, %33, %cst_22 [1, 2] : vector<1x2x1xf32> to vector<1xf32>
      %35 = vector.shape_cast %34 : vector<1xf32> to vector<1x1x1xf32>
      %36 = vector.extract %35[0, 0, 0] : f32 from vector<1x1x1xf32>
      %37 = vector.broadcast %36 : f32 to vector<1x1xf32>
      %cst_23 = arith.constant 2.000000e+00 : f32
      %38 = vector.broadcast %cst_23 : f32 to vector<1x1xf32>
      %39 = arith.divf %37, %38 : vector<1x1xf32>
      %c0_24 = arith.constant 0 : index
      %c0_25 = arith.constant 0 : index
      %40 = vector.load %arg5[%c0_24, %c0_25] : memref<1x1xf32, #tpu.memory_space<vmem>>, vector<1x1xf32>
      tpu.vector_store %arg5[%c0_24, %c0_25], %39 {strides = array<i32>} : memref<1x1xf32, #tpu.memory_space<vmem>>, vector<1x1xf32>,
    } else {
    }
    return
  }
  func.func @transform_0(%arg0: i32) -> (i32, i32, i32) {
    %c0_i32 = arith.constant 0 : i32
    %c0_i32_0 = arith.constant 0 : i32
    %c0_i32_1 = arith.constant 0 : i32
    return %c0_i32, %c0_i32_0, %arg0 : i32, i32, i32
  }
  func.func @transform_1(%arg0: i32) -> (i32, i32) {
    %c0_i32 = arith.constant 0 : i32
    %c0_i32_0 = arith.constant 0 : i32
    %c0_i32_1 = arith.constant 0 : i32
    return %c0_i32, %c0_i32_0 : i32, i32
  }
  func.func @transform_2(%arg0: i32) -> (i32, i32) {
    %c0_i32 = arith.constant 0 : i32
    %c0_i32_0 = arith.constant 0 : i32
    %c0_i32_1 = arith.constant 0 : i32
    return %c0_i32, %c0_i32_0 : i32, i32
  }
  func.func @transform_3(%arg0: i32) -> (i32, i32) {
    %c0_i32 = arith.constant 0 : i32
    %c0_i32_0 = arith.constant 0 : i32
    %c0_i32_1 = arith.constant 0 : i32
    return %c0_i32, %c0_i32_0 : i32, i32
  }
  func.func @transform_4(%arg0: i32) -> (i32, i32) {
    %c0_i32 = arith.constant 0 : i32
    %c0_i32_0 = arith.constant 0 : i32
    %c0_i32_1 = arith.constant 0 : i32
    return %c0_i32, %c0_i32_0 : i32, i32
  }
}

module attributes {stable_mosaic.version = 11 : i64} {
  func.func @_aug_teacher_kernel(%arg0: i32, %arg1: i32, %arg2: memref<1x2x8x256xbf16, #tpu.memory_space<vmem>>, %arg3: memref<8x128xf32, #tpu.memory_space<vmem>>, %arg4: memref<2x128xf32, #tpu.memory_space<vmem>>, %arg5: memref<2x8xf32, #tpu.memory_space<vmem>>) attributes {dimension_semantics = [#tpu.dimension_semantics<arbitrary>, #tpu.dimension_semantics<arbitrary>], iteration_bounds = array<i64: 4, 1>, scalar_prefetch = 0 : i64, scratch_operands = 1 : i64, tpu.core_type = #tpu.core_type<tc>, window_params = [{transform_indices = @transform_0, window_bounds = array<i64: 1, 2, 8, 256>}, {pipeline_mode = #tpu.pipeline_mode<synchronous>, transform_indices = @transform_1, window_bounds = array<i64: 8, 128>}, {pipeline_mode = #tpu.pipeline_mode<synchronous>, transform_indices = @transform_2, window_bounds = array<i64: 2, 128>}]} {
    %c0_i32 = arith.constant 0 : i32
    %0 = arith.cmpi eq, %arg0, %c0_i32 : i32
    %c0_i32_0 = arith.constant 0 : i32
    %1 = arith.cmpi eq, %arg1, %c0_i32_0 : i32
    %2 = arith.andi %0, %1 : i1
    %3 = arith.extui %2 : i1 to i32
    %c0_i32_1 = arith.constant 0 : i32
    %4 = arith.cmpi ne, %3, %c0_i32_1 : i32
    scf.if %4 {
      %cst_13 = arith.constant 0.000000e+00 : f32
      %18 = vector.broadcast %cst_13 : f32 to vector<2x128xf32>
      %c0_14 = arith.constant 0 : index
      %c0_15 = arith.constant 0 : index
      %19 = vector.load %arg4[%c0_14, %c0_15] : memref<2x128xf32, #tpu.memory_space<vmem>>, vector<2x128xf32>
      tpu.vector_store %arg4[%c0_14, %c0_15], %18 {strides = array<i32>} : memref<2x128xf32, #tpu.memory_space<vmem>>, vector<2x128xf32>,
    } else {
    }
    %c0_i32_2 = arith.constant 0 : i32
    %5 = arith.cmpi eq, %arg1, %c0_i32_2 : i32
    %6 = arith.extui %5 : i1 to i32
    %c0_i32_3 = arith.constant 0 : i32
    %7 = arith.cmpi ne, %6, %c0_i32_3 : i32
    scf.if %7 {
      %cst_13 = arith.constant 0.000000e+00 : f32
      %18 = vector.broadcast %cst_13 : f32 to vector<2x8xf32>
      %c0_14 = arith.constant 0 : index
      %c0_15 = arith.constant 0 : index
      %19 = vector.load %arg5[%c0_14, %c0_15] : memref<2x8xf32, #tpu.memory_space<vmem>>, vector<2x8xf32>
      tpu.vector_store %arg5[%c0_14, %c0_15], %18 {strides = array<i32>} : memref<2x8xf32, #tpu.memory_space<vmem>>, vector<2x8xf32>,
    } else {
    }
    %c0 = arith.constant 0 : index
    %c0_4 = arith.constant 0 : index
    %8 = vector.load %arg5[%c0, %c0_4] : memref<2x8xf32, #tpu.memory_space<vmem>>, vector<2x8xf32>
    %c0_5 = arith.constant 0 : index
    %c0_6 = arith.constant 0 : index
    %c0_7 = arith.constant 0 : index
    %c0_8 = arith.constant 0 : index
    %9 = vector.load %arg2[%c0_5, %c0_6, %c0_7, %c0_8] : memref<1x2x8x256xbf16, #tpu.memory_space<vmem>>, vector<1x2x8x256xbf16>
    %10 = vector.shape_cast %9 : vector<1x2x8x256xbf16> to vector<2x8x256xbf16>
    %11 = arith.extf %10 : vector<2x8x256xbf16> to vector<2x8x256xf32>
    %cst = arith.constant dense<0.000000e+00> : vector<2x8xf32>
    %12 = vector.multi_reduction <add>, %11, %cst [2] : vector<2x8x256xf32> to vector<2x8xf32>
    %13 = arith.addf %8, %12 : vector<2x8xf32>
    %c0_9 = arith.constant 0 : index
    %c0_10 = arith.constant 0 : index
    %14 = vector.load %arg5[%c0_9, %c0_10] : memref<2x8xf32, #tpu.memory_space<vmem>>, vector<2x8xf32>
    tpu.vector_store %arg5[%c0_9, %c0_10], %13 {strides = array<i32>} : memref<2x8xf32, #tpu.memory_space<vmem>>, vector<2x8xf32>,
    %c0_i32_11 = arith.constant 0 : i32
    %15 = arith.cmpi eq, %arg1, %c0_i32_11 : i32
    %16 = arith.extui %15 : i1 to i32
    %c0_i32_12 = arith.constant 0 : i32
    %17 = arith.cmpi ne, %16, %c0_i32_12 : i32
    scf.if %17 {
      %c0_13 = arith.constant 0 : index
      %c0_14 = arith.constant 0 : index
      %18 = vector.load %arg5[%c0_13, %c0_14] : memref<2x8xf32, #tpu.memory_space<vmem>>, vector<2x8xf32>
      %cst_15 = arith.constant 3.906250e-03 : f32
      %19 = vector.broadcast %cst_15 : f32 to vector<2x8xf32>
      %20 = arith.mulf %18, %19 : vector<2x8xf32>
      %c0_16 = arith.constant 0 : index
      %c0_17 = arith.constant 0 : index
      %21 = vector.load %arg4[%c0_16, %c0_17] : memref<2x128xf32, #tpu.memory_space<vmem>>, vector<2x128xf32>
      %c0_18 = arith.constant 0 : index
      %c0_19 = arith.constant 0 : index
      %22 = vector.load %arg3[%c0_18, %c0_19] : memref<8x128xf32, #tpu.memory_space<vmem>>, vector<8x128xf32>
      %cst_20 = arith.constant dense<0.000000e+00> : vector<2x128xf32>
      %23 = tpu.matmul %20, %22, %cst_20 {dimension_numbers = #tpu.dot_dimension_numbers<[1], [0], [0], [1], [0, 0, 1, 1], [], []>} : vector<2x8xf32>, vector<8x128xf32>, vector<2x128xf32> -> vector<2x128xf32>
      %cst_21 = arith.constant 2.500000e-01 : f32
      %24 = vector.broadcast %cst_21 : f32 to vector<2x128xf32>
      %25 = arith.mulf %24, %23 : vector<2x128xf32>
      %26 = arith.addf %21, %25 : vector<2x128xf32>
      %c0_22 = arith.constant 0 : index
      %c0_23 = arith.constant 0 : index
      %27 = vector.load %arg4[%c0_22, %c0_23] : memref<2x128xf32, #tpu.memory_space<vmem>>, vector<2x128xf32>
      tpu.vector_store %arg4[%c0_22, %c0_23], %26 {strides = array<i32>} : memref<2x128xf32, #tpu.memory_space<vmem>>, vector<2x128xf32>,
    } else {
    }
    return
  }
  func.func @transform_0(%arg0: i32, %arg1: i32) -> (i32, i32, i32, i32) {
    %c0_i32 = arith.constant 0 : i32
    %c0_i32_0 = arith.constant 0 : i32
    %c0_i32_1 = arith.constant 0 : i32
    return %arg0, %c0_i32, %c0_i32_0, %arg1 : i32, i32, i32, i32
  }
  func.func @transform_1(%arg0: i32, %arg1: i32) -> (i32, i32) {
    %c0_i32 = arith.constant 0 : i32
    %c0_i32_0 = arith.constant 0 : i32
    %c0_i32_1 = arith.constant 0 : i32
    return %c0_i32, %c0_i32_0 : i32, i32
  }
  func.func @transform_2(%arg0: i32, %arg1: i32) -> (i32, i32) {
    %c0_i32 = arith.constant 0 : i32
    %c0_i32_0 = arith.constant 0 : i32
    %c0_i32_1 = arith.constant 0 : i32
    return %c0_i32, %c0_i32_0 : i32, i32
  }
}

module attributes {stable_mosaic.version = 11 : i64} {
  func.func @_entropy_grad_kernel(%arg0: i32, %arg1: memref<2x128xf32, #tpu.memory_space<vmem>>, %arg2: memref<2x128xf32, #tpu.memory_space<vmem>>, %arg3: memref<2x8xf32, #tpu.memory_space<vmem>>, %arg4: memref<8x128xf32, #tpu.memory_space<vmem>>, %arg5: memref<1x1xf32, #tpu.memory_space<vmem>>) attributes {dimension_semantics = [#tpu.dimension_semantics<arbitrary>], iteration_bounds = array<i64: 1>, scalar_prefetch = 0 : i64, scratch_operands = 0 : i64, tpu.core_type = #tpu.core_type<tc>, window_params = [{pipeline_mode = #tpu.pipeline_mode<synchronous>, transform_indices = @transform_0, window_bounds = array<i64: 2, 128>}, {pipeline_mode = #tpu.pipeline_mode<synchronous>, transform_indices = @transform_1, window_bounds = array<i64: 2, 128>}, {pipeline_mode = #tpu.pipeline_mode<synchronous>, transform_indices = @transform_2, window_bounds = array<i64: 2, 8>}, {pipeline_mode = #tpu.pipeline_mode<synchronous>, transform_indices = @transform_3, window_bounds = array<i64: 8, 128>}, {pipeline_mode = #tpu.pipeline_mode<synchronous>, transform_indices = @transform_4, window_bounds = array<i64: 1, 1>}]} {
    %c0 = arith.constant 0 : index
    %c0_0 = arith.constant 0 : index
    %0 = vector.load %arg1[%c0, %c0_0] : memref<2x128xf32, #tpu.memory_space<vmem>>, vector<2x128xf32>
    %c0_1 = arith.constant 0 : index
    %c0_2 = arith.constant 0 : index
    %1 = vector.load %arg2[%c0_1, %c0_2] : memref<2x128xf32, #tpu.memory_space<vmem>>, vector<2x128xf32>
    %2 = tpu.iota {dimensions = array<i32: 1>} : vector<2x128xi32>
    %c10_i32 = arith.constant 10 : i32
    %3 = vector.broadcast %c10_i32 : i32 to vector<2x128xi32>
    %4 = arith.cmpi slt, %2, %3 : vector<2x128xi32>
    %cst = arith.constant -1.000000e+30 : f32
    %5 = vector.broadcast %cst : f32 to vector<2x128xf32>
    %6 = arith.select %4, %0, %5 : vector<2x128xi1>, vector<2x128xf32>
    %cst_3 = arith.constant -1.000000e+30 : f32
    %7 = vector.broadcast %cst_3 : f32 to vector<2x128xf32>
    %8 = arith.select %4, %1, %7 : vector<2x128xi1>, vector<2x128xf32>
    %cst_4 = arith.constant dense<0xFF800000> : vector<2xf32>
    %9 = vector.multi_reduction <maximumf>, %6, %cst_4 [1] : vector<2x128xf32> to vector<2xf32>
    %10 = vector.shape_cast %9 : vector<2xf32> to vector<2x1xf32>
    %11 = vector.broadcast %10 : vector<2x1xf32> to vector<2x128xf32>
    %12 = arith.subf %6, %11 : vector<2x128xf32>
    %13 = math.exp %12 : vector<2x128xf32>
    %cst_5 = arith.constant dense<0.000000e+00> : vector<2xf32>
    %14 = vector.multi_reduction <add>, %13, %cst_5 [1] : vector<2x128xf32> to vector<2xf32>
    %15 = vector.shape_cast %14 : vector<2xf32> to vector<2x1xf32>
    %16 = math.log %15 : vector<2x1xf32>
    %17 = vector.broadcast %16 : vector<2x1xf32> to vector<2x128xf32>
    %18 = arith.subf %12, %17 : vector<2x128xf32>
    %19 = tpu.reciprocal %15 {approx = true} : vector<2x1xf32> -> vector<2x1xf32>
    %20 = vector.broadcast %19 : vector<2x1xf32> to vector<2x128xf32>
    %21 = arith.mulf %13, %20 : vector<2x128xf32>
    %cst_6 = arith.constant dense<0xFF800000> : vector<2xf32>
    %22 = vector.multi_reduction <maximumf>, %8, %cst_6 [1] : vector<2x128xf32> to vector<2xf32>
    %23 = vector.shape_cast %22 : vector<2xf32> to vector<2x1xf32>
    %24 = vector.broadcast %23 : vector<2x1xf32> to vector<2x128xf32>
    %25 = arith.subf %8, %24 : vector<2x128xf32>
    %26 = math.exp %25 : vector<2x128xf32>
    %cst_7 = arith.constant dense<0.000000e+00> : vector<2xf32>
    %27 = vector.multi_reduction <add>, %26, %cst_7 [1] : vector<2x128xf32> to vector<2xf32>
    %28 = vector.shape_cast %27 : vector<2xf32> to vector<2x1xf32>
    %29 = tpu.reciprocal %28 {approx = true} : vector<2x1xf32> -> vector<2x1xf32>
    %30 = vector.broadcast %29 : vector<2x1xf32> to vector<2x128xf32>
    %31 = arith.mulf %26, %30 : vector<2x128xf32>
    %32 = arith.mulf %31, %18 : vector<2x128xf32>
    %cst_8 = arith.constant 0.000000e+00 : f32
    %33 = vector.broadcast %cst_8 : f32 to vector<2x128xf32>
    %34 = arith.select %4, %32, %33 : vector<2x128xi1>, vector<2x128xf32>
    %cst_9 = arith.constant dense<0.000000e+00> : vector<2xf32>
    %35 = vector.multi_reduction <add>, %34, %cst_9 [1] : vector<2x128xf32> to vector<2xf32>
    %36 = vector.shape_cast %35 : vector<2xf32> to vector<2x1xf32>
    %cst_10 = arith.constant 0.000000e+00 : f32
    %37 = vector.broadcast %cst_10 : f32 to vector<2x1xf32>
    %38 = arith.subf %37, %36 : vector<2x1xf32>
    %39 = vector.shape_cast %38 : vector<2x1xf32> to vector<1x2x1xf32>
    %cst_11 = arith.constant dense<0.000000e+00> : vector<1xf32>
    %40 = vector.multi_reduction <add>, %39, %cst_11 [1, 2] : vector<1x2x1xf32> to vector<1xf32>
    %41 = vector.shape_cast %40 : vector<1xf32> to vector<1x1x1xf32>
    %42 = vector.extract %41[0, 0, 0] : f32 from vector<1x1x1xf32>
    %43 = vector.broadcast %42 : f32 to vector<1x1xf32>
    %cst_12 = arith.constant 2.000000e+00 : f32
    %44 = vector.broadcast %cst_12 : f32 to vector<1x1xf32>
    %45 = arith.divf %43, %44 : vector<1x1xf32>
    %c0_13 = arith.constant 0 : index
    %c0_14 = arith.constant 0 : index
    %46 = vector.load %arg5[%c0_13, %c0_14] : memref<1x1xf32, #tpu.memory_space<vmem>>, vector<1x1xf32>
    tpu.vector_store %arg5[%c0_13, %c0_14], %45 {strides = array<i32>} : memref<1x1xf32, #tpu.memory_space<vmem>>, vector<1x1xf32>,
    %47 = arith.subf %21, %31 : vector<2x128xf32>
    %cst_15 = arith.constant 5.000000e-01 : f32
    %48 = vector.broadcast %cst_15 : f32 to vector<2x128xf32>
    %49 = arith.mulf %47, %48 : vector<2x128xf32>
    %cst_16 = arith.constant 0.000000e+00 : f32
    %50 = vector.broadcast %cst_16 : f32 to vector<2x128xf32>
    %51 = arith.select %4, %49, %50 : vector<2x128xi1>, vector<2x128xf32>
    %c0_17 = arith.constant 0 : index
    %c0_18 = arith.constant 0 : index
    %52 = vector.load %arg3[%c0_17, %c0_18] : memref<2x8xf32, #tpu.memory_space<vmem>>, vector<2x8xf32>
    %cst_19 = arith.constant dense<0.000000e+00> : vector<8x128xf32>
    %53 = tpu.matmul %52, %51, %cst_19 {dimension_numbers = #tpu.dot_dimension_numbers<[0], [0], [1], [1], [0, 1, 1, 1], [], []>} : vector<2x8xf32>, vector<2x128xf32>, vector<8x128xf32> -> vector<8x128xf32>
    %c0_20 = arith.constant 0 : index
    %c0_21 = arith.constant 0 : index
    %54 = vector.load %arg4[%c0_20, %c0_21] : memref<8x128xf32, #tpu.memory_space<vmem>>, vector<8x128xf32>
    tpu.vector_store %arg4[%c0_20, %c0_21], %53 {strides = array<i32>} : memref<8x128xf32, #tpu.memory_space<vmem>>, vector<8x128xf32>,
    return
  }
  func.func @transform_0(%arg0: i32) -> (i32, i32) {
    %c0_i32 = arith.constant 0 : i32
    %c0_i32_0 = arith.constant 0 : i32
    %c0_i32_1 = arith.constant 0 : i32
    return %c0_i32, %c0_i32_0 : i32, i32
  }
  func.func @transform_1(%arg0: i32) -> (i32, i32) {
    %c0_i32 = arith.constant 0 : i32
    %c0_i32_0 = arith.constant 0 : i32
    %c0_i32_1 = arith.constant 0 : i32
    return %c0_i32, %c0_i32_0 : i32, i32
  }
  func.func @transform_2(%arg0: i32) -> (i32, i32) {
    %c0_i32 = arith.constant 0 : i32
    %c0_i32_0 = arith.constant 0 : i32
    %c0_i32_1 = arith.constant 0 : i32
    return %c0_i32, %c0_i32_0 : i32, i32
  }
  func.func @transform_3(%arg0: i32) -> (i32, i32) {
    %c0_i32 = arith.constant 0 : i32
    %c0_i32_0 = arith.constant 0 : i32
    %c0_i32_1 = arith.constant 0 : i32
    return %c0_i32, %c0_i32_0 : i32, i32
  }
  func.func @transform_4(%arg0: i32) -> (i32, i32) {
    %c0_i32 = arith.constant 0 : i32
    %c0_i32_0 = arith.constant 0 : i32
    %c0_i32_1 = arith.constant 0 : i32
    return %c0_i32, %c0_i32_0 : i32, i32
  }
}

module attributes {stable_mosaic.version = 11 : i64} {
  func.func @_param_update_kernel(%arg0: i32, %arg1: memref<8x128xf32, #tpu.memory_space<vmem>>, %arg2: memref<8x128xf32, #tpu.memory_space<vmem>>, %arg3: memref<8x128xf32, #tpu.memory_space<vmem>>, %arg4: memref<8x128xf32, #tpu.memory_space<vmem>>, %arg5: memref<8x128xf32, #tpu.memory_space<vmem>>, %arg6: memref<8x128xf32, #tpu.memory_space<vmem>>, %arg7: memref<8x128xf32, #tpu.memory_space<vmem>>) attributes {dimension_semantics = [#tpu.dimension_semantics<arbitrary>], iteration_bounds = array<i64: 1>, scalar_prefetch = 0 : i64, scratch_operands = 0 : i64, tpu.core_type = #tpu.core_type<tc>, window_params = [{pipeline_mode = #tpu.pipeline_mode<synchronous>, transform_indices = @transform_0, window_bounds = array<i64: 8, 128>}, {pipeline_mode = #tpu.pipeline_mode<synchronous>, transform_indices = @transform_1, window_bounds = array<i64: 8, 128>}, {pipeline_mode = #tpu.pipeline_mode<synchronous>, transform_indices = @transform_2, window_bounds = array<i64: 8, 128>}, {pipeline_mode = #tpu.pipeline_mode<synchronous>, transform_indices = @transform_3, window_bounds = array<i64: 8, 128>}, {pipeline_mode = #tpu.pipeline_mode<synchronous>, transform_indices = @transform_4, window_bounds = array<i64: 8, 128>}, {pipeline_mode = #tpu.pipeline_mode<synchronous>, transform_indices = @transform_5, window_bounds = array<i64: 8, 128>}, {pipeline_mode = #tpu.pipeline_mode<synchronous>, transform_indices = @transform_6, window_bounds = array<i64: 8, 128>}]} {
    %c0 = arith.constant 0 : index
    %c0_0 = arith.constant 0 : index
    %0 = vector.load %arg1[%c0, %c0_0] : memref<8x128xf32, #tpu.memory_space<vmem>>, vector<8x128xf32>
    %c0_1 = arith.constant 0 : index
    %c0_2 = arith.constant 0 : index
    %1 = vector.load %arg2[%c0_1, %c0_2] : memref<8x128xf32, #tpu.memory_space<vmem>>, vector<8x128xf32>
    %cst = arith.constant 0.00999999977 : f32
    %2 = vector.broadcast %cst : f32 to vector<8x128xf32>
    %3 = arith.mulf %2, %1 : vector<8x128xf32>
    %4 = arith.subf %0, %3 : vector<8x128xf32>
    %c0_3 = arith.constant 0 : index
    %c0_4 = arith.constant 0 : index
    %5 = vector.load %arg3[%c0_3, %c0_4] : memref<8x128xf32, #tpu.memory_space<vmem>>, vector<8x128xf32>
    %cst_5 = arith.constant 9.990000e-01 : f32
    %6 = vector.broadcast %cst_5 : f32 to vector<8x128xf32>
    %7 = arith.mulf %6, %5 : vector<8x128xf32>
    %cst_6 = arith.constant 1.000000e-03 : f32
    %8 = vector.broadcast %cst_6 : f32 to vector<8x128xf32>
    %9 = arith.mulf %8, %4 : vector<8x128xf32>
    %10 = arith.addf %7, %9 : vector<8x128xf32>
    %c0_7 = arith.constant 0 : index
    %c0_8 = arith.constant 0 : index
    %11 = vector.load %arg7[%c0_7, %c0_8] : memref<8x128xf32, #tpu.memory_space<vmem>>, vector<8x128xf32>
    tpu.vector_store %arg7[%c0_7, %c0_8], %10 {strides = array<i32>} : memref<8x128xf32, #tpu.memory_space<vmem>>, vector<8x128xf32>,
    %c0_9 = arith.constant 0 : index
    %c0_10 = arith.constant 0 : index
    %12 = vector.load %arg5[%c0_9, %c0_10] : memref<8x128xf32, #tpu.memory_space<vmem>>, vector<8x128xf32>
    %c0_11 = arith.constant 0 : index
    %c0_12 = arith.constant 0 : index
    %13 = vector.load %arg4[%c0_11, %c0_12] : memref<8x128xf32, #tpu.memory_space<vmem>>, vector<8x128xf32>
    %14 = arith.mulf %13, %12 : vector<8x128xf32>
    %cst_13 = arith.constant 1.000000e+00 : f32
    %15 = vector.broadcast %cst_13 : f32 to vector<8x128xf32>
    %16 = arith.subf %15, %12 : vector<8x128xf32>
    %17 = arith.mulf %4, %16 : vector<8x128xf32>
    %18 = arith.addf %14, %17 : vector<8x128xf32>
    %c0_14 = arith.constant 0 : index
    %c0_15 = arith.constant 0 : index
    %19 = vector.load %arg6[%c0_14, %c0_15] : memref<8x128xf32, #tpu.memory_space<vmem>>, vector<8x128xf32>
    tpu.vector_store %arg6[%c0_14, %c0_15], %18 {strides = array<i32>} : memref<8x128xf32, #tpu.memory_space<vmem>>, vector<8x128xf32>,
    return
  }
  func.func @transform_0(%arg0: i32) -> (i32, i32) {
    %c0_i32 = arith.constant 0 : i32
    %c0_i32_0 = arith.constant 0 : i32
    %c0_i32_1 = arith.constant 0 : i32
    return %c0_i32, %c0_i32_0 : i32, i32
  }
  func.func @transform_1(%arg0: i32) -> (i32, i32) {
    %c0_i32 = arith.constant 0 : i32
    %c0_i32_0 = arith.constant 0 : i32
    %c0_i32_1 = arith.constant 0 : i32
    return %c0_i32, %c0_i32_0 : i32, i32
  }
  func.func @transform_2(%arg0: i32) -> (i32, i32) {
    %c0_i32 = arith.constant 0 : i32
    %c0_i32_0 = arith.constant 0 : i32
    %c0_i32_1 = arith.constant 0 : i32
    return %c0_i32, %c0_i32_0 : i32, i32
  }
  func.func @transform_3(%arg0: i32) -> (i32, i32) {
    %c0_i32 = arith.constant 0 : i32
    %c0_i32_0 = arith.constant 0 : i32
    %c0_i32_1 = arith.constant 0 : i32
    return %c0_i32, %c0_i32_0 : i32, i32
  }
  func.func @transform_4(%arg0: i32) -> (i32, i32) {
    %c0_i32 = arith.constant 0 : i32
    %c0_i32_0 = arith.constant 0 : i32
    %c0_i32_1 = arith.constant 0 : i32
    return %c0_i32, %c0_i32_0 : i32, i32
  }
  func.func @transform_5(%arg0: i32) -> (i32, i32) {
    %c0_i32 = arith.constant 0 : i32
    %c0_i32_0 = arith.constant 0 : i32
    %c0_i32_1 = arith.constant 0 : i32
    return %c0_i32, %c0_i32_0 : i32, i32
  }
  func.func @transform_6(%arg0: i32) -> (i32, i32) {
    %c0_i32 = arith.constant 0 : i32
    %c0_i32_0 = arith.constant 0 : i32
    %c0_i32_1 = arith.constant 0 : i32
    return %c0_i32, %c0_i32_0 : i32, i32
  }
}

</mosaic_0001>

<llo_original>
// kernel: step.3
$region0: #{step.3}
  #allocation0 [shape = 'u32[]', space=smem, size = 0x4, offset = 0x4, fixed_abs, tag = 'smem constant byte address 0x4 - core index']
  #allocation1 [shape = 'u32[144,128]{1,0:T(1,128)}', space=vmem, size = 0x12000, scoped, tag = 'internal scratch']
  %s0 = inlined_call_operand.vmem [shape: bf16[2,8,256], index: 0, kind: input, shape index: {}]
  %s1 = inlined_call_operand.vmem [shape: f32[8,384], index: 1, kind: input, shape index: {}]
  %s2 = inlined_call_operand.vmem [shape: f32[2,8], index: 2, kind: output, shape index: {0}]
  %s3 = inlined_call_operand.vmem [shape: f32[2,384], index: 3, kind: output, shape index: {1}]
  %s4 = inlined_call_operand.hbm [shape: f32[1,1], index: 4, kind: output, shape index: {2}]
  %5 = xla_tuple %s2, %s3, %s4
  %s6 = sld [smem:[#allocation0]]
  $region42: #{step.3} parent=0
    _
  %s8 = ssub.s32 1, %s6
  %s9 = scalar_select 0, %s8, %s6
  $region1: #{step.3} parent=0
    #allocation2 [shape = 'u8[512]{0}', space=vmem, size = 0x400, scoped, tag = 'output window, operand 2, single buffered']
    #allocation3 [shape = 's32[1]{0}', space=sflag, size = 0x4, scoped, tag = 'scoped memory for step.3']
    %10 = vsyncpa [#allocation3], 0
    // Predicated region
    $region2: #{step.3} parent=1 // pred_check
      _
    $region3: #{step.3} parent=1 // pred_check_branch
      %12 = sbr.rel (0) target = $region5
    $region4: #{step.3} parent=1 // pred_region
      _
    $region5: #{step.3} parent=1 // pred_fallthru
      _
    // Predicated region
    $region6: #{step.3} parent=1 // pred_check
      _
    $region7: #{step.3} parent=1 // pred_check_branch
      %14 = sbr.rel (0) target = $region9
    $region8: #{step.3} parent=1 // pred_region
      _
    $region9: #{step.3} parent=1 // pred_fallthru
      _
    %p15 = scmp.eq.s32.totalorder 0, 0
    // Predicated region
    $region10: #{step.3} parent=1 // pred_check
      %p16 = pneg %p15
    $region11: #{step.3} parent=1 // pred_check_branch
      %18 = sbr.rel (%p16) target = $region13
    $region12: #{step.3} parent=1 // pred_region
      %vm19 = vcmask 58368
      %20 = vst.msk [vmem:[%s2] sm:$0x3] %vm19, 0.0
    $region13: #{step.3} parent=1 // pred_fallthru
      _
    %v21 = vld [vmem:[%s2] sm:$0x3]
    %v22 = vld [vmem:[%s0] sm:$0xff]
    %v23 = vld [vmem:[%s0 + $0x8] sm:$0xff]
    %v24 = vunpack.c.l.bf16 %v22
    %v25 = vunpack.c.h.bf16 %v22
    %v26 = vunpack.c.l.bf16 %v23
    %v27 = vunpack.c.h.bf16 %v23
    %v28 = vadd.f32 %v24, %v25
    %29 = vadd.xlane.f32.xlu0 %v28
    %v30 = vpop.xlane.xlu0 %29
    %v31 = vadd.f32 %v26, %v27
    %32 = vadd.xlane.f32.xlu0 %v31
    %v33 = vpop.xlane.xlu0 %32
    %v36 = vlaneseq
    %v37 = vand.u32 %v36, 127
    %v38 = vlaneseq
    %v39 = vshrl.u32 %v38, 7
    %v40 = vsub.s32 %v37, %v39
    %v41 = vrot.slane %v30, %v40
    %v42 = vlaneseq
    %v43 = vshrl.u32 %v42, 7
    %v44 = vsub.s32 %v37, %v43
    %v45 = vrot.slane %v33, %v44
    %vm46 = vcmask 1041409
    %v47 = vsel %vm46, %v45, %v41
    %v49 = vadd.f32 %v21, %v47
    %vm50 = vcmask 58368
    %51 = vst.msk [vmem:[%s2] sm:$0x3] %vm50, %v49
    // Predicated region
    $region14: #{step.3} parent=1 // pred_check
      %p52 = pneg %p15
    $region15: #{step.3} parent=1 // pred_check_branch
      %54 = sbr.rel (%p52) target = $region17
    $region16: #{step.3} parent=1 // pred_region
      %v55 = vld [vmem:[%s2] sm:$0x3]
      %v56 = vmul.f32 %v55, 0.00390625
      %57 = vst.msk [vmem:[%s2] sm:$0x3] %vm50, %v56
      %v58 = vld [vmem:[%s1] sm:$0xff]
      %v59 = vld [vmem:[%s1 + $0x8] sm:$0xff]
      %v60 = vld [vmem:[%s1 + $0x10] sm:$0xff]
      %vm61 = vcmask 64512
      %v63 = vsel %vm61, %v56, 0
      %65 = vmatprep.subr.mxu0 %v59
      %66 = vmatpush1.msra.mxu0 %v58
      %67 = vmatprep.subr.mxu0 0.0
      %68 = vmatpush1.msra.mxu0 0.0
      %69 = vmatprep.subr.mxu0 0.0
      %70 = vmatpush1.msra.mxu0 0.0
      %71 = vmatprep.subr.mxu0 0.0
      %72 = vmatpush1.msra.mxu0 0.0
      %73 = vmatprep.subr.mxu0 0.0
      %74 = vmatpush1.msra.mxu0 0.0
      %75 = vmatprep.subr.mxu0 0.0
      %76 = vmatpush1.msra.mxu0 0.0
      %77 = vmatprep.subr.mxu0 0.0
      %78 = vmatpush1.msra.mxu0 0.0
      %79 = vmatprep.subr.mxu0 0.0
      %80 = vmatpush1.msra.mxu0 0.0
      %81 = vmatprep.subr.mxu0 0.0
      %82 = vmatpush1.msra.mxu0 0.0
      %83 = vmatprep.subr.mxu0 0.0
      %84 = vmatpush1.msra.mxu0 0.0
      %85 = vmatprep.subr.mxu0 0.0
      %86 = vmatpush1.msra.mxu0 0.0
      %87 = vmatprep.subr.mxu0 0.0
      %88 = vmatpush1.msra.mxu0 0.0
      %89 = vmatprep.subr.mxu0 0.0
      %90 = vmatpush1.msra.mxu0 0.0
      %91 = vmatprep.subr.mxu0 0.0
      %92 = vmatpush1.msra.mxu0 0.0
      %93 = vmatprep.subr.mxu0 0.0
      %94 = vmatpush1.msra.mxu0 0.0
      %95 = vmatprep.subr.mxu0 0.0
      %96 = vmatpush1.msra.mxu0 0.0
      %97 = vmatprep.subr.mxu0 0.0
      %98 = vmatpush1.msra.mxu0 0.0
      %99 = vmatprep.subr.mxu0 0.0
      %100 = vmatpush1.msra.mxu0 0.0
      %101 = vmatprep.subr.mxu0 0.0
      %102 = vmatpush1.msra.mxu0 0.0
      %103 = vmatprep.subr.mxu0 0.0
      %104 = vmatpush1.msra.mxu0 0.0
      %105 = vmatprep.subr.mxu0 0.0
      %106 = vmatpush1.msra.mxu0 0.0
      %107 = vmatprep.subr.mxu0 0.0
      %108 = vmatpush1.msra.mxu0 0.0
      %109 = vmatprep.subr.mxu0 0.0
      %110 = vmatpush1.msra.mxu0 0.0
      %111 = vmatprep.subr.mxu0 0.0
      %112 = vmatpush1.msra.mxu0 0.0
      %113 = vmatprep.subr.mxu0 0.0
      %114 = vmatpush1.msra.mxu0 0.0
      %115 = vmatprep.subr.mxu0 0.0
      %116 = vmatpush1.msra.mxu0 0.0
      %117 = vmatprep.subr.mxu0 0.0
      %118 = vmatpush1.msra.mxu0 0.0
      %119 = vmatprep.subr.mxu0 0.0
      %120 = vmatpush1.msra.mxu0 0.0
      %121 = vmatprep.subr.mxu0 0.0
      %122 = vmatpush1.msra.mxu0 0.0
      %123 = vmatprep.subr.mxu0 0.0
      %124 = vmatpush1.msra.mxu0 0.0
      %125 = vmatprep.subr.mxu0 0.0
      %126 = vmatpush1.msra.mxu0 0.0
      %127 = vmatprep.subr.mxu0 0.0
      %128 = vmatpush1.msra.mxu0 0.0
      %129 = vmatprep.mubr.f32.mxu0 0.0
      %130 = vmatmul.mubr.f32.gmra.mrb[0].mxu0 %v63
      %v131 = vpop.f32.mrb[0].mxu0
      %v132 = vadd.f32 0.0, %v131
      %v133 = vpop.f32.mrb[0].mxu0
      %v134 = vadd.f32 0.0, %v133
      %135 = vdwg.mxu0
      %136 = vmatprep.subr.mxu0 0.0
      %137 = vmatpush1.msra.mxu0 %v60
      %138 = vmatprep.subr.mxu0 0.0
      %139 = vmatpush1.msra.mxu0 0.0
      %140 = vmatprep.subr.mxu0 0.0
      %141 = vmatpush1.msra.mxu0 0.0
      %142 = vmatprep.subr.mxu0 0.0
      %143 = vmatpush1.msra.mxu0 0.0
      %144 = vmatprep.subr.mxu0 0.0
      %145 = vmatpush1.msra.mxu0 0.0
      %146 = vmatprep.subr.mxu0 0.0
      %147 = vmatpush1.msra.mxu0 0.0
      %148 = vmatprep.subr.mxu0 0.0
      %149 = vmatpush1.msra.mxu0 0.0
      %150 = vmatprep.subr.mxu0 0.0
      %151 = vmatpush1.msra.mxu0 0.0
      %152 = vmatprep.subr.mxu0 0.0
      %153 = vmatpush1.msra.mxu0 0.0
      %154 = vmatprep.subr.mxu0 0.0
      %155 = vmatpush1.msra.mxu0 0.0
      %156 = vmatprep.subr.mxu0 0.0
      %157 = vmatpush1.msra.mxu0 0.0
      %158 = vmatprep.subr.mxu0 0.0
      %159 = vmatpush1.msra.mxu0 0.0
      %160 = vmatprep.subr.mxu0 0.0
      %161 = vmatpush1.msra.mxu0 0.0
      %162 = vmatprep.subr.mxu0 0.0
      %163 = vmatpush1.msra.mxu0 0.0
      %164 = vmatprep.subr.mxu0 0.0
      %165 = vmatpush1.msra.mxu0 0.0
      %166 = vmatprep.subr.mxu0 0.0
      %167 = vmatpush1.msra.mxu0 0.0
      %168 = vmatprep.subr.mxu0 0.0
      %169 = vmatpush1.msra.mxu0 0.0
      %170 = vmatprep.subr.mxu0 0.0
      %171 = vmatpush1.msra.mxu0 0.0
      %172 = vmatprep.subr.mxu0 0.0
      %173 = vmatpush1.msra.mxu0 0.0
      %174 = vmatprep.subr.mxu0 0.0
      %175 = vmatpush1.msra.mxu0 0.0
      %176 = vmatprep.subr.mxu0 0.0
      %177 = vmatpush1.msra.mxu0 0.0
      %178 = vmatprep.subr.mxu0 0.0
      %179 = vmatpush1.msra.mxu0 0.0
      %180 = vmatprep.subr.mxu0 0.0
      %181 = vmatpush1.msra.mxu0 0.0
      %182 = vmatprep.subr.mxu0 0.0
      %183 = vmatpush1.msra.mxu0 0.0
      %184 = vmatprep.subr.mxu0 0.0
      %185 = vmatpush1.msra.mxu0 0.0
      %186 = vmatprep.subr.mxu0 0.0
      %187 = vmatpush1.msra.mxu0 0.0
      %188 = vmatprep.subr.mxu0 0.0
      %189 = vmatpush1.msra.mxu0 0.0
      %190 = vmatprep.subr.mxu0 0.0
      %191 = vmatpush1.msra.mxu0 0.0
      %192 = vmatprep.subr.mxu0 0.0
      %193 = vmatpush1.msra.mxu0 0.0
      %194 = vmatprep.subr.mxu0 0.0
      %195 = vmatpush1.msra.mxu0 0.0
      %196 = vmatprep.subr.mxu0 0.0
      %197 = vmatpush1.msra.mxu0 0.0
      %198 = vmatprep.subr.mxu0 0.0
      %199 = vmatpush1.msra.mxu0 0.0
      %200 = vmatprep.mubr.f32.mxu0 0.0
      %201 = vmatmul.mubr.f32.gmra.mrb[0].mxu0 %v63
      %v202 = vpop.f32.mrb[0].mxu0
      %v203 = vadd.f32 0.0, %v202
      %v204 = vpop.f32.mrb[0].mxu0
      %205 = vdwg.mxu0
      %v209 = vcombine.low %v132, %v134
      %v211 = vunpack.c.l.s4 1983009808
      %v212 = vunpack.c.0.s8 %v211
      %v213 = vlaneseq
      %v214 = vshrl.u32 %v213, 7
      %v215 = vsub.s32 %v212, %v214
      %v216 = vrot.slane %v209, %v215
      %v218 = vunpack.c.l.s4 1983009808
      %v219 = vunpack.c.0.s8 %v218
      %v220 = vlaneseq
      %v221 = vshrl.u32 %v220, 7
      %v222 = vsub.s32 %v219, %v221
      %v223 = vrot.slane %v203, %v222
      %v224 = vcombine.low %v216, %v223
      %226 = vst [vmem:[%s3] sm:$0x3f] %v224
      %vm227 = vcmp.lt.s32.totalorder %v37, 10
      %v228 = vsel %vm227, %v134, -1e+30
      %vm229 = vcmask 1041408
      %v230 = vsel %vm229, %v228, -inf
      %231 = vmax.xlane.f32.xlu0 %v230
      %v232 = vpop.xlane.xlu0 %231
      %v233 = vsub.f32 %v228, %v232
      %v234 = vmul.f32 %v233, 1.442695
      %v235 = vpow.pop %v234
      %v236 = vsel %vm229, %v235, 0.0
      %237 = vadd.xlane.f32.xlu0 %v236
      %v238 = vpop.xlane.xlu0 %237
      %v239 = vrcp.pop %v238
      %vm240 = vcmask 1024
      %v241 = vsel %vm240, %v239, 0.0
      %242 = vadd.xlane.f32.xlu0 %v241
      %v243 = vpop.xlane.xlu0 %242
      %v244 = vrot.slane %v243, 4
      %v245 = vadd.f32 %v243, %v244
      %v246 = vrot.slane %v245, 2
      %v247 = vadd.f32 %v245, %v246
      %v248 = vrot.slane %v247, 1
      %v249 = vadd.f32 %v247, %v248
      %s250 = vtos %v249
      %v251 = vstv %s250
      %v252 = vrcp.pop 2.0
      %v253 = vmul.f32 %v251, %v252
      %vm254 = vcmask 0
      %255 = vst.msk [vmem:[#allocation2] sm:$0x1] %vm254, %v253
    $region17: #{step.3} parent=1 // pred_fallthru
      _
    // Predicated region
    $region18: #{step.3} parent=1 // pred_check
      _
    $region19: #{step.3} parent=1 // pred_check_branch
      %257 = sbr.rel (0) target = $region21
    $region20: #{step.3} parent=1 // pred_region
      _
    $region21: #{step.3} parent=1 // pred_fallthru
      _
    // Predicated region
    $region22: #{step.3} parent=1 // pred_check
      _
    $region23: #{step.3} parent=1 // pred_check_branch
      %259 = sbr.rel (0) target = $region25
    $region24: #{step.3} parent=1 // pred_region
      _
    $region25: #{step.3} parent=1 // pred_fallthru
      _
    // Predicated region
    $region26: #{step.3} parent=1 // pred_check
      _
    $region27: #{step.3} parent=1 // pred_check_branch
      %261 = sbr.rel (0) target = $region29
    $region28: #{step.3} parent=1 // pred_region
      %s263 = ssub.s32 16, 16
      %264 = vsyncadd [#allocation3], %s263
      %s266 = sshll.u32 [#allocation2], 4
      %s267 = int_to_ptr.vmem [resolvable:$true] %s266
      %269 = dma.vmem_to_hbm [thread:$0]  %s267, 16, %s4, [#allocation3]
    $region29: #{step.3} parent=1 // pred_fallthru
      _
    // Predicated region
    $region30: #{step.3} parent=1 // pred_check
      _
    $region31: #{step.3} parent=1 // pred_check_branch
      %271 = sbr.rel (0) target = $region33
    $region32: #{step.3} parent=1 // pred_region
      _
    $region33: #{step.3} parent=1 // pred_fallthru
      _
    // Predicated region
    $region34: #{step.3} parent=1 // pred_check
      _
    $region35: #{step.3} parent=1 // pred_check_branch
      %273 = sbr.rel (0) target = $region37
    $region36: #{step.3} parent=1 // pred_region
      _
    $region37: #{step.3} parent=1 // pred_fallthru
      _
    // Predicated region
    $region38: #{step.3} parent=1 // pred_check
      _
    $region39: #{step.3} parent=1 // pred_check_branch
      %275 = sbr.rel (0) target = $region41
    $region40: #{step.3} parent=1 // pred_region
      %276 = dma.done [#allocation3], 16
    $region41: #{step.3} parent=1 // pred_fallthru
      _
    %277 = vsyncpa [#allocation3], 1

// kernel: branch_1_fun.1
$region0: #{branch_1_fun.1}
  #allocation0 [shape = 'u32[]', space=smem, size = 0x4, offset = 0x4, fixed_abs, tag = 'smem constant byte address 0x4 - core index']
  #allocation1 [shape = 'u32[144,128]{1,0:T(1,128)}', space=vmem, size = 0x12000, scoped, tag = 'internal scratch']
  #allocation2 [shape = 'f32[2,8]{1,0:T(2,128)}', space=vmem, size = 0x400, scoped, tag = 'scratch operand']
  %s0 = inlined_call_operand.vmem [shape: bf16[4,2,8,256], index: 0, kind: input, shape index: {}]
  %s1 = inlined_call_operand.vmem [shape: f32[8,128], index: 1, kind: input, shape index: {}]
  %s2 = inlined_call_operand.vmem [shape: f32[2,128], index: 2, kind: output, shape index: {}]
  %s3 = sld [smem:[#allocation0]]
  $region53: #{branch_1_fun.1} parent=0
    _
  %s5 = ssub.s32 1, %s3
  %s6 = scalar_select 0, %s5, %s3
  loop: start=0, step=1, limit=6
  $region2: #{branch_1_fun.1} parent=0 // loop_pre_header
    _
  $region3: #{branch_1_fun.1} parent=0 // loop_header
    %s8 = sphi 0, %s12
    %p9 = scmp.ge.s32.totalorder %s8, 6
    %s15 = sphi 0, %s27
    %s16 = sphi 0, %s23
    %s17 = sphi 0, %s15
    %s18 = sphi 0, %s16
    %s19 = sphi 0, %s17
    %s20 = sphi 0, %s18
    %s32 = sphi 0, %s34
    %s35 = sphi 0, %s32
    %s36 = sphi 0, %s35
    %s52 = sphi 0, %s36
    %s56 = sphi 0, %s56
    %s58 = sphi 0, %s56
    %s59 = sphi 0, %s58
    %s73 = sphi 0, %s59
    %s77 = sphi 0, %s77
    %s79 = sphi 0, %s77
    %s80 = sphi 0, %s79
    %s94 = sphi 0, %s80
  $region4: #{branch_1_fun.1} parent=0 // loop_header_branch
    %11 = sbr.rel (%p9) target = $region8
  $region5: #{branch_1_fun.1} parent=0 // loop_body
    %s13 = ssub.s32 %s8, 1
    %s14 = ssub.s32 %s8, 2
    %s21 = sadd.s32 1, %s16
    %p22 = scmp.ge.s32.totalorder %s21, 1
    %s23 = scalar_select %p22, 0, %s21
    %s24 = sadd.s32 1, %s15
    %s25 = scalar_select %p22, %s24, %s15
    %p26 = scmp.ge.s32.totalorder %s25, 4
    %s27 = scalar_select %p26, 0, %s25
    %s28 = ssub.s32 %s15, %s27
    %s29 = ssub.s32 %s16, %s23
    %s30 = sor.u32 %s28, %s29
    %p31 = scmp.eq.s32.totalorder %s30, 0
    %s33 = sadd.s32 %s32, 1
    %s34 = scalar_select %p31, %s32, %s33
    %p37 = pneg %p31
    %p38 = scmp.eq.s32.totalorder %s8, 3
    %p39 = por %p37, %p38
    %p40 = scmp.ne.s32.totalorder %s32, %s35
    %p41 = scmp.eq.s32.totalorder %s8, 0
    %p42 = por %p40, %p41
    %p43 = scmp.ne.s32.totalorder %s32, %s35
    %p44 = scmp.eq.s32.totalorder %s13, 3
    %p45 = por %p43, %p44
    %p46 = scmp.ne.s32.totalorder %s35, %s36
    %p47 = scmp.eq.s32.totalorder %s13, 0
    %p48 = por %p46, %p47
    %p49 = scmp.ne.s32.totalorder %s35, %s36
    %p50 = scmp.eq.s32.totalorder %s14, 3
    %p51 = por %p49, %p50
    %p53 = scmp.ne.s32.totalorder %s36, %s52
    %p54 = scmp.eq.s32.totalorder %s14, 0
    %p55 = por %p53, %p54
    %s57 = sadd.s32 %s56, 1
    %p60 = scmp.eq.s32.totalorder %s8, 3
    %p61 = scmp.ne.s32.totalorder %s56, %s58
    %p62 = scmp.eq.s32.totalorder %s8, 0
    %p63 = por %p61, %p62
    %p64 = scmp.ne.s32.totalorder %s56, %s58
    %p65 = scmp.eq.s32.totalorder %s13, 3
    %p66 = por %p64, %p65
    %p67 = scmp.ne.s32.totalorder %s58, %s59
    %p68 = scmp.eq.s32.totalorder %s13, 0
    %p69 = por %p67, %p68
    %p70 = scmp.ne.s32.totalorder %s58, %s59
    %p71 = scmp.eq.s32.totalorder %s14, 3
    %p72 = por %p70, %p71
    %p74 = scmp.ne.s32.totalorder %s59, %s73
    %p75 = scmp.eq.s32.totalorder %s14, 0
    %p76 = por %p74, %p75
    %s78 = sadd.s32 %s77, 1
    %p81 = scmp.eq.s32.totalorder %s8, 3
    %p82 = scmp.ne.s32.totalorder %s77, %s79
    %p83 = scmp.eq.s32.totalorder %s8, 0
    %p84 = por %p82, %p83
    %p85 = scmp.ne.s32.totalorder %s77, %s79
    %p86 = scmp.eq.s32.totalorder %s13, 3
    %p87 = por %p85, %p86
    %p88 = scmp.ne.s32.totalorder %s79, %s80
    %p89 = scmp.eq.s32.totalorder %s13, 0
    %p90 = por %p88, %p89
    %p91 = scmp.ne.s32.totalorder %s79, %s80
    %p92 = scmp.eq.s32.totalorder %s14, 3
    %p93 = por %p91, %p92
    %p95 = scmp.ne.s32.totalorder %s80, %s94
    %p96 = scmp.eq.s32.totalorder %s14, 0
    %p97 = por %p95, %p96
    %p98 = scmp.le.s32.totalorder 1, %s8
    %p99 = scmp.lt.s32.totalorder %s8, 5
    %p100 = pnand %p98, %p99
    %p101 = pneg %p100
    // Predicated region
    $region9: #{branch_1_fun.1} parent=5 // pred_check
      _
    $region10: #{branch_1_fun.1} parent=5 // pred_check_branch
      %103 = sbr.rel (%p100) target = $region12
    $region11: #{branch_1_fun.1} parent=5 // pred_region
      %s104 = ssub.s32 %s8, 1
      // Predicated region
      $region13: #{branch_1_fun.1} parent=11 // pred_check
        %p105 = pneg %p69
      $region14: #{branch_1_fun.1} parent=11 // pred_check_branch
        %107 = sbr.rel (%p105) target = $region16
      $region15: #{branch_1_fun.1} parent=11 // pred_region
        _
      $region16: #{branch_1_fun.1} parent=11 // pred_fallthru
        _
    $region12: #{branch_1_fun.1} parent=5 // pred_fallthru
      _
    %p108 = scmp.lt.s32.totalorder %s8, 4
    // Predicated region
    $region17: #{branch_1_fun.1} parent=5 // pred_check
      %p109 = pneg %p108
    $region18: #{branch_1_fun.1} parent=5 // pred_check_branch
      %111 = sbr.rel (%p109) target = $region20
    $region19: #{branch_1_fun.1} parent=5 // pred_region
      // Predicated region
      $region21: #{branch_1_fun.1} parent=19 // pred_check
        %p112 = pneg %p42
      $region22: #{branch_1_fun.1} parent=19 // pred_check_branch
        %114 = sbr.rel (%p112) target = $region24
      $region23: #{branch_1_fun.1} parent=19 // pred_region
        %s115 = smul.u32 2, %s16
        %p116 = scmp.lt.s32.totalorder %s15, 3
        %s117 = scalar_select %p116, %s15, 3
        %p118 = scmp.lt.s32.totalorder %s115, 1
        %s119 = scalar_select %p118, %s115, 1
        %s120 = smul.addr %s117, 4
        %s121 = sadd.s32 %s119, %s120
        %s122 = smul.addr %s121, 4
        %s123 = scalar_lea.vmem %s0, %s122
        %s124 = smul.u32 2, %s16
      $region24: #{branch_1_fun.1} parent=19 // pred_fallthru
        _
    $region20: #{branch_1_fun.1} parent=5 // pred_fallthru
      _
    %p125 = scmp.le.s32.totalorder 1, %s8
    %p126 = scmp.lt.s32.totalorder %s8, 5
    %p127 = pnand %p125, %p126
    %p128 = pneg %p127
    // Predicated region
    $region25: #{branch_1_fun.1} parent=5 // pred_check
      _
    $region26: #{branch_1_fun.1} parent=5 // pred_check_branch
      %130 = sbr.rel (%p127) target = $region28
    $region27: #{branch_1_fun.1} parent=5 // pred_region
      %s131 = ssub.s32 %s8, 1
      %s132 = smul.u32 2, %s18
      %p133 = scmp.lt.s32.totalorder %s17, 3
      %s134 = scalar_select %p133, %s17, 3
      %p135 = scmp.lt.s32.totalorder %s132, 1
      %s136 = scalar_select %p135, %s132, 1
      %s137 = smul.addr %s134, 4
      %s138 = sadd.s32 %s136, %s137
      %s139 = smul.addr %s138, 4
      %s140 = scalar_lea.vmem %s0, %s139
      %p141 = pneg %p48
      %p142 = pneg %p45
      %p143 = pneg %p69
      %p144 = pneg %p66
      %p145 = pneg %p90
      %p146 = pneg %p87
      %s147 = smul.u32 2, %s18
      %p148 = scmp.lt.s32.totalorder %s17, 3
      %s149 = scalar_select %p148, %s17, 3
      %p150 = scmp.lt.s32.totalorder %s147, 1
      %s151 = scalar_select %p150, %s147, 1
      %s152 = smul.addr %s149, 4
      %s153 = sadd.s32 %s151, %s152
      %s154 = smul.addr %s153, 4
      %s155 = scalar_lea.vmem %s0, %s154
      %s156 = smul.u32 2, %s18
      %p157 = scmp.eq.s32.totalorder %s17, 0
      %p158 = scmp.eq.s32.totalorder %s18, 0
      %p159 = pnand %p157, %p158
      %p160 = pneg %p159
      // Predicated region
      $region29: #{branch_1_fun.1} parent=27 // pred_check
        _
      $region30: #{branch_1_fun.1} parent=27 // pred_check_branch
        %162 = sbr.rel (%p159) target = $region32
      $region31: #{branch_1_fun.1} parent=27 // pred_region
        %163 = vst [vmem:[%s2] sm:$0x3] 0.0
      $region32: #{branch_1_fun.1} parent=27 // pred_fallthru
        _
      // Predicated region
      $region33: #{branch_1_fun.1} parent=27 // pred_check
        %p164 = pneg %p158
      $region34: #{branch_1_fun.1} parent=27 // pred_check_branch
        %166 = sbr.rel (%p164) target = $region36
      $region35: #{branch_1_fun.1} parent=27 // pred_region
        %vm167 = vcmask 58368
        %168 = vst.msk [vmem:[#allocation2] sm:$0x3] %vm167, 0.0
      $region36: #{branch_1_fun.1} parent=27 // pred_fallthru
        _
      %v169 = vld [vmem:[#allocation2] sm:$0x3]
      %v170 = vld [vmem:[%s155] sm:$0xff]
      %v171 = vld [vmem:[%s155 + $0x8] sm:$0xff]
      %v172 = vunpack.c.l.bf16 %v170
      %v173 = vunpack.c.h.bf16 %v170
      %v174 = vunpack.c.l.bf16 %v171
      %v175 = vunpack.c.h.bf16 %v171
      %v176 = vadd.f32 %v172, %v173
      %177 = vadd.xlane.f32.xlu0 %v176
      %v178 = vpop.xlane.xlu0 %177
      %v179 = vadd.f32 %v174, %v175
      %180 = vadd.xlane.f32.xlu0 %v179
      %v181 = vpop.xlane.xlu0 %180
      %v184 = vlaneseq
      %v185 = vand.u32 %v184, 127
      %v186 = vlaneseq
      %v187 = vshrl.u32 %v186, 7
      %v188 = vsub.s32 %v185, %v187
      %v189 = vrot.slane %v178, %v188
      %v190 = vlaneseq
      %v191 = vshrl.u32 %v190, 7
      %v192 = vsub.s32 %v185, %v191
      %v193 = vrot.slane %v181, %v192
      %vm194 = vcmask 1041409
      %v195 = vsel %vm194, %v193, %v189
      %v197 = vadd.f32 %v169, %v195
      %vm198 = vcmask 58368
      %199 = vst.msk [vmem:[#allocation2] sm:$0x3] %vm198, %v197
      // Predicated region
      $region37: #{branch_1_fun.1} parent=27 // pred_check
        %p200 = pneg %p158
      $region38: #{branch_1_fun.1} parent=27 // pred_check_branch
        %202 = sbr.rel (%p200) target = $region40
      $region39: #{branch_1_fun.1} parent=27 // pred_region
        %v203 = vld [vmem:[#allocation2] sm:$0x3]
        %v204 = vmul.f32 %v203, 0.00390625
        %v205 = vld [vmem:[%s2] sm:$0x3]
        %v206 = vld [vmem:[%s1] sm:$0xff]
        %vm207 = vcmask 64512
        %v209 = vsel %vm207, %v204, 0
        %211 = vmatprep.subr.mxu0 0.0
        %212 = vmatpush1.msra.mxu0 %v206
        %213 = vmatprep.subr.mxu0 0.0
        %214 = vmatpush1.msra.mxu0 0.0
        %215 = vmatprep.subr.mxu0 0.0
        %216 = vmatpush1.msra.mxu0 0.0
        %217 = vmatprep.subr.mxu0 0.0
        %218 = vmatpush1.msra.mxu0 0.0
        %219 = vmatprep.subr.mxu0 0.0
        %220 = vmatpush1.msra.mxu0 0.0
        %221 = vmatprep.subr.mxu0 0.0
        %222 = vmatpush1.msra.mxu0 0.0
        %223 = vmatprep.subr.mxu0 0.0
        %224 = vmatpush1.msra.mxu0 0.0
        %225 = vmatprep.subr.mxu0 0.0
        %226 = vmatpush1.msra.mxu0 0.0
        %227 = vmatprep.subr.mxu0 0.0
        %228 = vmatpush1.msra.mxu0 0.0
        %229 = vmatprep.subr.mxu0 0.0
        %230 = vmatpush1.msra.mxu0 0.0
        %231 = vmatprep.subr.mxu0 0.0
        %232 = vmatpush1.msra.mxu0 0.0
        %233 = vmatprep.subr.mxu0 0.0
        %234 = vmatpush1.msra.mxu0 0.0
        %235 = vmatprep.subr.mxu0 0.0
        %236 = vmatpush1.msra.mxu0 0.0
        %237 = vmatprep.subr.mxu0 0.0
        %238 = vmatpush1.msra.mxu0 0.0
        %239 = vmatprep.subr.mxu0 0.0
        %240 = vmatpush1.msra.mxu0 0.0
        %241 = vmatprep.subr.mxu0 0.0
        %242 = vmatpush1.msra.mxu0 0.0
        %243 = vmatprep.subr.mxu0 0.0
        %244 = vmatpush1.msra.mxu0 0.0
        %245 = vmatprep.subr.mxu0 0.0
        %246 = vmatpush1.msra.mxu0 0.0
        %247 = vmatprep.subr.mxu0 0.0
        %248 = vmatpush1.msra.mxu0 0.0
        %249 = vmatprep.subr.mxu0 0.0
        %250 = vmatpush1.msra.mxu0 0.0
        %251 = vmatprep.subr.mxu0 0.0
        %252 = vmatpush1.msra.mxu0 0.0
        %253 = vmatprep.subr.mxu0 0.0
        %254 = vmatpush1.msra.mxu0 0.0
        %255 = vmatprep.subr.mxu0 0.0
        %256 = vmatpush1.msra.mxu0 0.0
        %257 = vmatprep.subr.mxu0 0.0
        %258 = vmatpush1.msra.mxu0 0.0
        %259 = vmatprep.subr.mxu0 0.0
        %260 = vmatpush1.msra.mxu0 0.0
        %261 = vmatprep.subr.mxu0 0.0
        %262 = vmatpush1.msra.mxu0 0.0
        %263 = vmatprep.subr.mxu0 0.0
        %264 = vmatpush1.msra.mxu0 0.0
        %265 = vmatprep.subr.mxu0 0.0
        %266 = vmatpush1.msra.mxu0 0.0
        %267 = vmatprep.subr.mxu0 0.0
        %268 = vmatpush1.msra.mxu0 0.0
        %269 = vmatprep.subr.mxu0 0.0
        %270 = vmatpush1.msra.mxu0 0.0
        %271 = vmatprep.subr.mxu0 0.0
        %272 = vmatpush1.msra.mxu0 0.0
        %273 = vmatprep.subr.mxu0 0.0
        %274 = vmatpush1.msra.mxu0 0.0
        %275 = vmatprep.mubr.f32.mxu0 0.0
        %276 = vmatmul.mubr.f32.gmra.mrb[0].mxu0 %v209
        %v277 = vpop.f32.mrb[0].mxu0
        %v278 = vadd.f32 0.0, %v277
        %v279 = vpop.f32.mrb[0].mxu0
        %280 = vdwg.mxu0
        %v281 = vmul.f32 %v278, 0.25
        %v282 = vadd.f32 %v205, %v281
        %283 = vst [vmem:[%s2] sm:$0x3] %v282
      $region40: #{branch_1_fun.1} parent=27 // pred_fallthru
        _
      // Predicated region
      $region41: #{branch_1_fun.1} parent=27 // pred_check
        %p284 = pneg %p87
      $region42: #{branch_1_fun.1} parent=27 // pred_check_branch
        %286 = sbr.rel (%p284) target = $region44
      $region43: #{branch_1_fun.1} parent=27 // pred_region
        _
      $region44: #{branch_1_fun.1} parent=27 // pred_fallthru
        _
      // Predicated region
      $region45: #{branch_1_fun.1} parent=27 // pred_check
        %p287 = pneg %p87
      $region46: #{branch_1_fun.1} parent=27 // pred_check_branch
        %289 = sbr.rel (%p287) target = $region48
      $region47: #{branch_1_fun.1} parent=27 // pred_region
        _
      $region48: #{branch_1_fun.1} parent=27 // pred_fallthru
        _
    $region28: #{branch_1_fun.1} parent=5 // pred_fallthru
      _
    %p290 = scmp.le.s32.totalorder 2, %s8
    // Predicated region
    $region49: #{branch_1_fun.1} parent=5 // pred_check
      %p291 = pneg %p290
    $region50: #{branch_1_fun.1} parent=5 // pred_check_branch
      %293 = sbr.rel (%p291) target = $region52
    $region51: #{branch_1_fun.1} parent=5 // pred_region
      %s294 = ssub.s32 %s8, 2
    $region52: #{branch_1_fun.1} parent=5 // pred_fallthru
      _
  $region6: #{branch_1_fun.1} parent=0 // loop_footer
    %s12 = sadd.s32 1, %s8
  $region7: #{branch_1_fun.1} parent=0 // loop_footer_branch
    %7 = sbr.rel target = $region3
  $region8: #{branch_1_fun.1} parent=0 // loop_exit
    _

// kernel: step.4
$region0: #{step.4}
  #allocation0 [shape = 'u32[]', space=smem, size = 0x4, offset = 0x4, fixed_abs, tag = 'smem constant byte address 0x4 - core index']
  #allocation1 [shape = 'u32[144,128]{1,0:T(1,128)}', space=vmem, size = 0x12000, scoped, tag = 'internal scratch']
  %s0 = inlined_call_operand.vmem [shape: f32[2,128], index: 0, kind: input, shape index: {}]
  %s1 = inlined_call_operand.vmem [shape: f32[2,128], index: 1, kind: input, shape index: {}]
  %s2 = inlined_call_operand.vmem [shape: f32[2,8], index: 2, kind: input, shape index: {}]
  %s3 = inlined_call_operand.vmem [shape: f32[8,128], index: 3, kind: output, shape index: {0}]
  %s4 = inlined_call_operand.hbm [shape: f32[1,1], index: 4, kind: output, shape index: {1}]
  %5 = xla_tuple %s3, %s4
  %s6 = sld [smem:[#allocation0]]
  $region30: #{step.4} parent=0
    _
  %s8 = ssub.s32 1, %s6
  %s9 = scalar_select 0, %s8, %s6
  $region1: #{step.4} parent=0
    #allocation2 [shape = 'u8[512]{0}', space=vmem, size = 0x400, scoped, tag = 'output window, operand 1, single buffered']
    #allocation3 [shape = 's32[1]{0}', space=sflag, size = 0x4, scoped, tag = 'scoped memory for step.4']
    %10 = vsyncpa [#allocation3], 0
    // Predicated region
    $region2: #{step.4} parent=1 // pred_check
      _
    $region3: #{step.4} parent=1 // pred_check_branch
      %12 = sbr.rel (0) target = $region5
    $region4: #{step.4} parent=1 // pred_region
      _
    $region5: #{step.4} parent=1 // pred_fallthru
      _
    // Predicated region
    $region6: #{step.4} parent=1 // pred_check
      _
    $region7: #{step.4} parent=1 // pred_check_branch
      %14 = sbr.rel (0) target = $region9
    $region8: #{step.4} parent=1 // pred_region
      _
    $region9: #{step.4} parent=1 // pred_fallthru
      _
    // Predicated region
    $region10: #{step.4} parent=1 // pred_check
      _
    $region11: #{step.4} parent=1 // pred_check_branch
      %16 = sbr.rel (0) target = $region13
    $region12: #{step.4} parent=1 // pred_region
      _
    $region13: #{step.4} parent=1 // pred_fallthru
      _
    %v17 = vld [vmem:[%s0] sm:$0x3]
    %v18 = vld [vmem:[%s1] sm:$0x3]
    %v19 = vlaneseq
    %v20 = vand.u32 %v19, 127
    %vm21 = vcmp.lt.s32.totalorder %v20, 10
    %v22 = vsel %vm21, %v17, -1e+30
    %v23 = vsel %vm21, %v18, -1e+30
    %vm24 = vcmask 1041408
    %v25 = vsel %vm24, %v22, -inf
    %26 = vmax.xlane.f32.xlu0 %v25
    %v27 = vpop.xlane.xlu0 %26
    %v28 = vsub.f32 %v22, %v27
    %v29 = vmul.f32 %v28, 1.442695
    %v30 = vpow.pop %v29
    %v31 = vsel %vm24, %v30, 0.0
    %32 = vadd.xlane.f32.xlu0 %v31
    %v33 = vpop.xlane.xlu0 %32
    %v34 = vlog2.pop %v33
    %v35 = vmul.f32 %v34, 0.6931472
    %v36 = vsub.f32 %v28, %v35
    %v37 = vrcp.pop %v33
    %v38 = vmul.f32 %v30, %v37
    %v39 = vsel %vm24, %v23, -inf
    %40 = vmax.xlane.f32.xlu0 %v39
    %v41 = vpop.xlane.xlu0 %40
    %v42 = vsub.f32 %v23, %v41
    %v43 = vmul.f32 %v42, 1.442695
    %v44 = vpow.pop %v43
    %v45 = vsel %vm24, %v44, 0.0
    %46 = vadd.xlane.f32.xlu0 %v45
    %v47 = vpop.xlane.xlu0 %46
    %v48 = vrcp.pop %v47
    %v49 = vmul.f32 %v44, %v48
    %v50 = vmul.f32 %v49, %v36
    %v51 = vsel %vm21, %v50, 0.0
    %v52 = vsel %vm24, %v51, 0.0
    %53 = vadd.xlane.f32.xlu0 %v52
    %v54 = vpop.xlane.xlu0 %53
    %v55 = vsub.f32 0.0, %v54
    %vm56 = vcmask 1024
    %v57 = vsel %vm56, %v55, 0.0
    %58 = vadd.xlane.f32.xlu0 %v57
    %v59 = vpop.xlane.xlu0 %58
    %v60 = vrot.slane %v59, 4
    %v61 = vadd.f32 %v59, %v60
    %v62 = vrot.slane %v61, 2
    %v63 = vadd.f32 %v61, %v62
    %v64 = vrot.slane %v63, 1
    %v65 = vadd.f32 %v63, %v64
    %s66 = vtos %v65
    %v67 = vstv %s66
    %v68 = vrcp.pop 2.0
    %v69 = vmul.f32 %v67, %v68
    %vm70 = vcmask 0
    %71 = vst.msk [vmem:[#allocation2] sm:$0x1] %vm70, %v69
    %v72 = vsub.f32 %v38, %v49
    %v73 = vmul.f32 %v72, 0.5
    %v74 = vsel %vm21, %v73, 0.0
    %v75 = vld [vmem:[%s2] sm:$0x3]
    %76 = vxpose.xlu0.b32.start [1/16] %v75, 128
    %77 = vxpose.xlu0.b32.cont [2/16] 0.0, 128
    %78 = vxpose.xlu0.b32.cont [3/16] 0.0, 128
    %79 = vxpose.xlu0.b32.cont [4/16] 0.0, 128
    %80 = vxpose.xlu0.b32.cont [5/16] 0.0, 128
    %81 = vxpose.xlu0.b32.cont [6/16] 0.0, 128
    %82 = vxpose.xlu0.b32.cont [7/16] 0.0, 128
    %83 = vxpose.xlu0.b32.cont [8/16] 0.0, 128
    %84 = vxpose.xlu0.b32.cont [9/16] 0.0, 128
    %85 = vxpose.xlu0.b32.cont [10/16] 0.0, 128
    %86 = vxpose.xlu0.b32.cont [11/16] 0.0, 128
    %87 = vxpose.xlu0.b32.cont [12/16] 0.0, 128
    %88 = vxpose.xlu0.b32.cont [13/16] 0.0, 128
    %89 = vxpose.xlu0.b32.cont [14/16] 0.0, 128
    %90 = vxpose.xlu0.b32.cont [15/16] 0.0, 128
    %91 = vxpose.xlu0.b32.end [16/16] 0.0, 128
    %v92 = vpop.trf.xlu0
    %v93 = vpop.trf.xlu0
    %v94 = vpop.trf.xlu0
    %v95 = vpop.trf.xlu0
    %v96 = vpop.trf.xlu0
    %v97 = vpop.trf.xlu0
    %v98 = vpop.trf.xlu0
    %v99 = vpop.trf.xlu0
    %v100 = vpop.trf.xlu0
    %v101 = vpop.trf.xlu0
    %v102 = vpop.trf.xlu0
    %v103 = vpop.trf.xlu0
    %v104 = vpop.trf.xlu0
    %v105 = vpop.trf.xlu0
    %v106 = vpop.trf.xlu0
    %v107 = vpop.trf.xlu0
    %vm108 = vcmask 15360
    %v110 = vsel %vm108, %v92, 0
    %v113 = vsel %vm24, %v74, 0
    %115 = vmatprep.subr.mxu0 0.0
    %116 = vmatpush1.msra.mxu0 %v113
    %117 = vmatprep.subr.mxu0 0.0
    %118 = vmatpush1.msra.mxu0 0.0
    %119 = vmatprep.subr.mxu0 0.0
    %120 = vmatpush1.msra.mxu0 0.0
    %121 = vmatprep.subr.mxu0 0.0
    %122 = vmatpush1.msra.mxu0 0.0
    %123 = vmatprep.subr.mxu0 0.0
    %124 = vmatpush1.msra.mxu0 0.0
    %125 = vmatprep.subr.mxu0 0.0
    %126 = vmatpush1.msra.mxu0 0.0
    %127 = vmatprep.subr.mxu0 0.0
    %128 = vmatpush1.msra.mxu0 0.0
    %129 = vmatprep.subr.mxu0 0.0
    %130 = vmatpush1.msra.mxu0 0.0
    %131 = vmatprep.subr.mxu0 0.0
    %132 = vmatpush1.msra.mxu0 0.0
    %133 = vmatprep.subr.mxu0 0.0
    %134 = vmatpush1.msra.mxu0 0.0
    %135 = vmatprep.subr.mxu0 0.0
    %136 = vmatpush1.msra.mxu0 0.0
    %137 = vmatprep.subr.mxu0 0.0
    %138 = vmatpush1.msra.mxu0 0.0
    %139 = vmatprep.subr.mxu0 0.0
    %140 = vmatpush1.msra.mxu0 0.0
    %141 = vmatprep.subr.mxu0 0.0
    %142 = vmatpush1.msra.mxu0 0.0
    %143 = vmatprep.subr.mxu0 0.0
    %144 = vmatpush1.msra.mxu0 0.0
    %145 = vmatprep.subr.mxu0 0.0
    %146 = vmatpush1.msra.mxu0 0.0
    %147 = vmatprep.subr.mxu0 0.0
    %148 = vmatpush1.msra.mxu0 0.0
    %149 = vmatprep.subr.mxu0 0.0
    %150 = vmatpush1.msra.mxu0 0.0
    %151 = vmatprep.subr.mxu0 0.0
    %152 = vmatpush1.msra.mxu0 0.0
    %153 = vmatprep.subr.mxu0 0.0
    %154 = vmatpush1.msra.mxu0 0.0
    %155 = vmatprep.subr.mxu0 0.0
    %156 = vmatpush1.msra.mxu0 0.0
    %157 = vmatprep.subr.mxu0 0.0
    %158 = vmatpush1.msra.mxu0 0.0
    %159 = vmatprep.subr.mxu0 0.0
    %160 = vmatpush1.msra.mxu0 0.0
    %161 = vmatprep.subr.mxu0 0.0
    %162 = vmatpush1.msra.mxu0 0.0
    %163 = vmatprep.subr.mxu0 0.0
    %164 = vmatpush1.msra.mxu0 0.0
    %165 = vmatprep.subr.mxu0 0.0
    %166 = vmatpush1.msra.mxu0 0.0
    %167 = vmatprep.subr.mxu0 0.0
    %168 = vmatpush1.msra.mxu0 0.0
    %169 = vmatprep.subr.mxu0 0.0
    %170 = vmatpush1.msra.mxu0 0.0
    %171 = vmatprep.subr.mxu0 0.0
    %172 = vmatpush1.msra.mxu0 0.0
    %173 = vmatprep.subr.mxu0 0.0
    %174 = vmatpush1.msra.mxu0 0.0
    %175 = vmatprep.subr.mxu0 0.0
    %176 = vmatpush1.msra.mxu0 0.0
    %177 = vmatprep.subr.mxu0 0.0
    %178 = vmatpush1.msra.mxu0 0.0
    %179 = vmatprep.mubr.f32.mxu0 0.0
    %180 = vmatmul.mubr.f32.gmra.mrb[0].mxu0 %v110
    %v181 = vpop.f32.mrb[0].mxu0
    %v182 = vadd.f32 0.0, %v181
    %v183 = vpop.f32.mrb[0].mxu0
    %184 = vdwg.mxu0
    %185 = vst [vmem:[%s3] sm:$0xff] %v182
    // Predicated region
    $region14: #{step.4} parent=1 // pred_check
      _
    $region15: #{step.4} parent=1 // pred_check_branch
      %187 = sbr.rel (0) target = $region17
    $region16: #{step.4} parent=1 // pred_region
      _
    $region17: #{step.4} parent=1 // pred_fallthru
      _
    // Predicated region
    $region18: #{step.4} parent=1 // pred_check
      _
    $region19: #{step.4} parent=1 // pred_check_branch
      %189 = sbr.rel (0) target = $region21
    $region20: #{step.4} parent=1 // pred_region
      %s191 = ssub.s32 16, 16
      %192 = vsyncadd [#allocation3], %s191
      %s194 = sshll.u32 [#allocation2], 4
      %s195 = int_to_ptr.vmem [resolvable:$true] %s194
      %197 = dma.vmem_to_hbm [thread:$0]  %s195, 16, %s4, [#allocation3]
    $region21: #{step.4} parent=1 // pred_fallthru
      _
    // Predicated region
    $region22: #{step.4} parent=1 // pred_check
      _
    $region23: #{step.4} parent=1 // pred_check_branch
      %199 = sbr.rel (0) target = $region25
    $region24: #{step.4} parent=1 // pred_region
      _
    $region25: #{step.4} parent=1 // pred_fallthru
      _
    // Predicated region
    $region26: #{step.4} parent=1 // pred_check
      _
    $region27: #{step.4} parent=1 // pred_check_branch
      %201 = sbr.rel (0) target = $region29
    $region28: #{step.4} parent=1 // pred_region
      %202 = dma.done [#allocation3], 16
    $region29: #{step.4} parent=1 // pred_fallthru
      _
    %203 = vsyncpa [#allocation3], 1

// kernel: step.5
$region0: #{step.5}
  #allocation0 [shape = 'u32[]', space=smem, size = 0x4, offset = 0x4, fixed_abs, tag = 'smem constant byte address 0x4 - core index']
  #allocation1 [shape = 'u32[144,128]{1,0:T(1,128)}', space=vmem, size = 0x12000, scoped, tag = 'internal scratch']
  %s0 = inlined_call_operand.vmem [shape: f32[8,128], index: 0, kind: input, shape index: {}, may-alias: {0,5}]
  %s1 = inlined_call_operand.vmem [shape: f32[8,128], index: 1, kind: input, shape index: {}]
  %s2 = inlined_call_operand.vmem [shape: f32[8,128], index: 2, kind: input, shape index: {}, may-alias: {2,6}]
  %s3 = inlined_call_operand.vmem [shape: f32[8,128], index: 3, kind: input, shape index: {}]
  %s4 = inlined_call_operand.vmem [shape: f32[8,128], index: 4, kind: input, shape index: {}]
  %s5 = inlined_call_operand.vmem [shape: f32[8,128], index: 5, kind: output, shape index: {0}, may-alias: {0,5}]
  %s6 = inlined_call_operand.vmem [shape: f32[8,128], index: 6, kind: output, shape index: {1}, may-alias: {2,6}]
  %7 = xla_tuple %s5, %s6
  %s8 = sld [smem:[#allocation0]]
  $region38: #{step.5} parent=0
    _
  %s10 = ssub.s32 1, %s8
  %s11 = scalar_select 0, %s10, %s8
  // Predicated region
  $region2: #{step.5} parent=0 // pred_check
    _
  $region3: #{step.5} parent=0 // pred_check_branch
    %13 = sbr.rel (0) target = $region5
  $region4: #{step.5} parent=0 // pred_region
    _
  $region5: #{step.5} parent=0 // pred_fallthru
    _
  // Predicated region
  $region6: #{step.5} parent=0 // pred_check
    _
  $region7: #{step.5} parent=0 // pred_check_branch
    %15 = sbr.rel (0) target = $region9
  $region8: #{step.5} parent=0 // pred_region
    _
  $region9: #{step.5} parent=0 // pred_fallthru
    _
  // Predicated region
  $region10: #{step.5} parent=0 // pred_check
    _
  $region11: #{step.5} parent=0 // pred_check_branch
    %17 = sbr.rel (0) target = $region13
  $region12: #{step.5} parent=0 // pred_region
    _
  $region13: #{step.5} parent=0 // pred_fallthru
    _
  // Predicated region
  $region14: #{step.5} parent=0 // pred_check
    _
  $region15: #{step.5} parent=0 // pred_check_branch
    %19 = sbr.rel (0) target = $region17
  $region16: #{step.5} parent=0 // pred_region
    _
  $region17: #{step.5} parent=0 // pred_fallthru
    _
  // Predicated region
  $region18: #{step.5} parent=0 // pred_check
    _
  $region19: #{step.5} parent=0 // pred_check_branch
    %21 = sbr.rel (0) target = $region21
  $region20: #{step.5} parent=0 // pred_region
    _
  $region21: #{step.5} parent=0 // pred_fallthru
    _
  %v22 = vld [vmem:[%s0] sm:$0xff]
  %v23 = vld [vmem:[%s1] sm:$0xff]
  %v24 = vmul.f32 %v23, 0.01
  %v25 = vsub.f32 %v22, %v24
  %v26 = vld [vmem:[%s2] sm:$0xff]
  %v27 = vmul.f32 %v26, 0.999
  %v28 = vmul.f32 %v25, 0.001
  %v29 = vadd.f32 %v27, %v28
  %30 = vst [vmem:[%s6] sm:$0xff] %v29
  %v31 = vld [vmem:[%s4] sm:$0xff]
  %v32 = vld [vmem:[%s3] sm:$0xff]
  %v33 = vmul.f32 %v32, %v31
  %v34 = vsub.f32 1.0, %v31
  %v35 = vmul.f32 %v25, %v34
  %v36 = vadd.f32 %v33, %v35
  %37 = vst [vmem:[%s5] sm:$0xff] %v36
  // Predicated region
  $region22: #{step.5} parent=0 // pred_check
    _
  $region23: #{step.5} parent=0 // pred_check_branch
    %39 = sbr.rel (0) target = $region25
  $region24: #{step.5} parent=0 // pred_region
    _
  $region25: #{step.5} parent=0 // pred_fallthru
    _
  // Predicated region
  $region26: #{step.5} parent=0 // pred_check
    _
  $region27: #{step.5} parent=0 // pred_check_branch
    %41 = sbr.rel (0) target = $region29
  $region28: #{step.5} parent=0 // pred_region
    _
  $region29: #{step.5} parent=0 // pred_fallthru
    _
  // Predicated region
  $region30: #{step.5} parent=0 // pred_check
    _
  $region31: #{step.5} parent=0 // pred_check_branch
    %43 = sbr.rel (0) target = $region33
  $region32: #{step.5} parent=0 // pred_region
    _
  $region33: #{step.5} parent=0 // pred_fallthru
    _
  // Predicated region
  $region34: #{step.5} parent=0 // pred_check
    _
  $region35: #{step.5} parent=0 // pred_check_branch
    %45 = sbr.rel (0) target = $region37
  $region36: #{step.5} parent=0 // pred_region
    _
  $region37: #{step.5} parent=0 // pred_fallthru
    _

</llo_original>
